<compile_context>
chip_gen: v5e
topology: v5e:2x2
jax: 0.10.0
libtpu: 0.0.40
codegen_flags: <defaults>
</compile_context>

<pallas_src>
import math
import jax
import jax.numpy as jnp
from jax import lax
from jax.experimental import pallas as pl
from jax.experimental.pallas import tpu as pltpu

# Small, module-consistent hyperparameters ("opt")
EMBED_DIM = 32      # opt.embedding_dim
NHEAD = 4           # opt.nhead
DIM_FF = 64         # opt.dim_feedforward
NUM_LAYERS = 2      # opt.num_layers
SEQ = 8
BATCH = 2
OUT_DIM = 6
LN_EPS = 1e-5
MASK_NEG = -1e30
LEAKY_SLOPE = 0.1


def pose_transformer_kernel(x_ref, mask_ref, wqk_ref, bqk_ref, wvo_ref,
                            w1_ref, b1_ref, w2_ref, vec_ref,
                            fcw_ref, fcb_ref, out_ref):
    N = BATCH * SEQ
    D, H = EMBED_DIM, NHEAD
    dh = D // H

    x = x_ref[...]                                                   # (N, D), pos already added
    mask_bias = mask_ref[...]                                        # (H*N, N)

    def layer_norm(v, w, b):
        mu = jnp.mean(v, axis=-1, keepdims=True)
        var = jnp.mean((v - mu) ** 2, axis=-1, keepdims=True)
        return (v - mu) * lax.rsqrt(var + LN_EPS) * w + b

    for l in range(NUM_LAYERS):                                      # static unroll over layers
        # --- multi-head self-attention ------------------------------------------------
        # one fused projection: lanes [0:D) = scaled Q, [D:2D) = K (head h owns lanes h*dh..)
        qk = jnp.dot(x, wqk_ref[l], preferred_element_type=jnp.float32) + bqk_ref[l]   # (N, 2D)

        # per-head (N, N) scores, sublane-stacked into (H*N, N) for one shared softmax
        s = jnp.concatenate(
            [jnp.dot(qk[:, h * dh:(h + 1) * dh],
                     qk[:, D + h * dh:D + (h + 1) * dh].T,
                     preferred_element_type=jnp.float32) for h in range(H)],
            axis=0) + mask_bias                                       # (H*N, N)

        m = jnp.max(s, axis=-1, keepdims=True)
        p = jnp.exp(s - m)
        p = p * pl.reciprocal(jnp.sum(p, axis=-1, keepdims=True), approx=True)

        # all head contexts in one matmul, then fold Wvo_h per head (sublane slices are free)
        c = jnp.dot(p, x, preferred_element_type=jnp.float32)         # (H*N, D)
        attn = jnp.dot(c[0:N], wvo_ref[l, 0], preferred_element_type=jnp.float32)
        for h in range(1, H):
            attn = attn + jnp.dot(c[h * N:(h + 1) * N], wvo_ref[l, h],
                                  preferred_element_type=jnp.float32)

        # vec[l]: 0 = attn bias (bv @ Wo + bo), 1/2 = ln1 w/b, 3 = b2, 4/5 = ln2 w/b
        x = layer_norm(x + attn + vec_ref[l, 0], vec_ref[l, 1], vec_ref[l, 2])

        # --- feed-forward ----------------------------------------------------------------
        h1 = jnp.dot(x, w1_ref[l], preferred_element_type=jnp.float32) + b1_ref[l]
        h1 = jnp.maximum(h1, 0.0)                                     # relu (PyTorch default)
        ff = jnp.dot(h1, w2_ref[l], preferred_element_type=jnp.float32) + vec_ref[l, 3]
        x = layer_norm(x + ff, vec_ref[l, 4], vec_ref[l, 5])

    # fc head: Linear(D, D) -> LeakyReLU(0.1) -> Linear(D, 6)  (fc2 padded to D columns so the
    # store is lane-dense; wrapper slices the first OUT_DIM columns)
    hh = jnp.dot(x, fcw_ref[0], preferred_element_type=jnp.float32) + fcb_ref[0]
    hh = jnp.where(hh >= 0.0, hh, LEAKY_SLOPE * hh)
    out_ref[...] = jnp.dot(hh, fcw_ref[1], preferred_element_type=jnp.float32) + fcb_ref[1]


def positional_embedding(seq_length, d):
    pos = jnp.arange(seq_length, dtype=jnp.float32)[:, None]
    div_term = jnp.exp(jnp.arange(0, d, 2, dtype=jnp.float32) * (-(math.log(10000.0) / d)))
    pe = jnp.zeros((seq_length, d), jnp.float32)
    pe = pe.at[:, 0::2].set(jnp.sin(pos * div_term))
    pe = pe.at[:, 1::2].set(jnp.cos(pos * div_term))
    return pe


def init_params(key):
    """Natural (unfused) parameters in the x @ W convention."""
    L, D, F = NUM_LAYERS, EMBED_DIM, DIM_FF
    ks = jax.random.split(key, 16)
    s = 0.05
    return {
        "wq": s * jax.random.normal(ks[0], (L, D, D), jnp.float32),
        "wk": s * jax.random.normal(ks[1], (L, D, D), jnp.float32),
        "wv": s * jax.random.normal(ks[2], (L, D, D), jnp.float32),
        "bq": s * jax.random.normal(ks[3], (L, 1, D), jnp.float32),
        "bk": s * jax.random.normal(ks[4], (L, 1, D), jnp.float32),
        "bv": s * jax.random.normal(ks[5], (L, 1, D), jnp.float32),
        "wo": s * jax.random.normal(ks[6], (L, D, D), jnp.float32),
        "bo": s * jax.random.normal(ks[7], (L, 1, D), jnp.float32),
        "ln1w": jnp.ones((L, 1, D), jnp.float32),
        "ln1b": jnp.zeros((L, 1, D), jnp.float32),
        "ln2w": jnp.ones((L, 1, D), jnp.float32),
        "ln2b": jnp.zeros((L, 1, D), jnp.float32),
        "w1": s * jax.random.normal(ks[8], (L, D, F), jnp.float32),
        "b1": s * jax.random.normal(ks[9], (L, 1, F), jnp.float32),
        "w2": s * jax.random.normal(ks[10], (L, F, D), jnp.float32),
        "b2": s * jax.random.normal(ks[11], (L, 1, D), jnp.float32),
        "fc1w": s * jax.random.normal(ks[12], (D, D), jnp.float32),
        "fc1b": s * jax.random.normal(ks[13], (1, D), jnp.float32),
        "fc2w": s * jax.random.normal(ks[14], (D, OUT_DIM), jnp.float32),
        "fc2b": s * jax.random.normal(ks[15], (1, OUT_DIM), jnp.float32),
    }


def pack_params(p):
    """Host-side fusion/packing of natural params into the kernel layout (exact rewrites)."""
    L, D, H, dh = NUM_LAYERS, EMBED_DIM, NHEAD, EMBED_DIM // NHEAD
    scale = 1.0 / math.sqrt(dh)

    # Fused QK projection: (L, D, 2D); softmax scale folded into the Q half (weights AND bias).
    wqk = jnp.concatenate([p["wq"] * scale, p["wk"]], axis=-1)        # (L, D, 2D)
    bqk = jnp.concatenate([p["bq"] * scale, p["bk"]], axis=-1)        # (L, 1, 2D)

    # Fold out-projection into V per head: Wvo[l,h] = Wv[:, sl] @ Wo[sl, :]  -> (L, H, D, D)
    wv_h = p["wv"].reshape(L, D, H, dh).transpose(0, 2, 1, 3)         # (L, H, D, dh)
    wo_h = p["wo"].reshape(L, H, dh, D)                               # (L, H, dh, D)
    wvo = jnp.einsum("lhdk,lhke->lhde", wv_h, wo_h)

    # Attention bias: softmax rows sum to 1  =>  contribution of bv is bv @ Wo; add bo.
    attn_b = jnp.einsum("lxd,lde->lxe", p["bv"], p["wo"]) + p["bo"]   # (L, 1, D)

    # Per-layer D-wide vectors stacked into one blob.
    vec = jnp.stack([attn_b, p["ln1w"], p["ln1b"], p["b2"], p["ln2w"], p["ln2b"]], axis=1)

    # fc head: pad fc2 to D output columns (extra columns are exactly zero) and stack.
    fcw = jnp.stack([p["fc1w"], jnp.pad(p["fc2w"], ((0, 0), (0, D - OUT_DIM)))], axis=0)
    fcb = jnp.stack([p["fc1b"], jnp.pad(p["fc2b"], ((0, 0), (0, D - OUT_DIM)))], axis=0)

    return {"wqk": wqk, "bqk": bqk, "wvo": wvo,
            "w1": p["w1"], "b1": p["b1"], "w2": p["w2"],
            "vec": vec, "fcw": fcw, "fcb": fcb}


def pose_transformer(x, packed):
    B, S, D = x.shape
    assert (B, S, D) == (BATCH, SEQ, EMBED_DIM)
    N = B * S

    # Positional-embedding add folded into the input on the host (review: trim kernel prologue).
    pos = positional_embedding(S, D)
    x_flat = x.reshape(N, D) + jnp.tile(pos, (B, 1))                  # (N, D)

    # Block-diagonal (per batch element) causal additive mask, host-precomputed and tiled for
    # the H sublane-stacked heads used by the merged softmax.
    row = jnp.arange(N, dtype=jnp.int32)[:, None]
    col = jnp.arange(N, dtype=jnp.int32)[None, :]
    allowed = (row // S == col // S) & (col <= row)
    mask = jnp.where(allowed, 0.0, MASK_NEG).astype(jnp.float32)      # (N, N)
    mask = jnp.tile(mask, (NHEAD, 1))                                 # (H*N, N)

    args = (x_flat, mask, packed["wqk"], packed["bqk"], packed["wvo"],
            packed["w1"], packed["b1"], packed["w2"], packed["vec"],
            packed["fcw"], packed["fcb"])

    def full_spec(a):
        nd = a.ndim
        return pl.BlockSpec(a.shape, lambda i, _nd=nd: (0,) * _nd)

    out_padded = pl.pallas_call(
        pose_transformer_kernel,
        out_shape=jax.ShapeDtypeStruct((N, D), jnp.float32),
        grid=(1,),
        in_specs=[full_spec(a) for a in args],
        out_specs=pl.BlockSpec((N, D), lambda i: (0, 0)),
        compiler_params=pltpu.CompilerParams(dimension_semantics=("arbitrary",)),
    )(*args)

    # lane-dense (N, D) slab -> real (B, S, 6) output
    return out_padded[:, :OUT_DIM].reshape(B, S, OUT_DIM)


if __name__ == "__main__":
    x = jax.random.normal(jax.random.PRNGKey(0), (BATCH, SEQ, EMBED_DIM), jnp.float32)
    params = pack_params(init_params(jax.random.PRNGKey(1)))
    out = pose_transformer(x, params)
    jax.block_until_ready(out)
    assert out.shape == (BATCH, SEQ, OUT_DIM)
    assert bool(jnp.all(jnp.isfinite(out)))
    print("KERNEL_OK")
</pallas_src>

<mosaic_0001>
module attributes {stable_mosaic.version = 11 : i64} {
  func.func @pose_transformer_kernel(%arg0: i32, %arg1: memref<16x32xf32, #tpu.memory_space<vmem>>, %arg2: memref<64x16xf32, #tpu.memory_space<vmem>>, %arg3: memref<2x32x64xf32, #tpu.memory_space<vmem>>, %arg4: memref<2x1x64xf32, #tpu.memory_space<vmem>>, %arg5: memref<2x4x32x32xf32, #tpu.memory_space<vmem>>, %arg6: memref<2x32x64xf32, #tpu.memory_space<vmem>>, %arg7: memref<2x1x64xf32, #tpu.memory_space<vmem>>, %arg8: memref<2x64x32xf32, #tpu.memory_space<vmem>>, %arg9: memref<2x6x1x32xf32, #tpu.memory_space<vmem>>, %arg10: memref<2x32x32xf32, #tpu.memory_space<vmem>>, %arg11: memref<2x1x32xf32, #tpu.memory_space<vmem>>, %arg12: memref<16x32xf32, #tpu.memory_space<vmem>>) attributes {dimension_semantics = [#tpu.dimension_semantics<arbitrary>], iteration_bounds = array<i64: 1>, scalar_prefetch = 0 : i64, scratch_operands = 0 : i64, tpu.core_type = #tpu.core_type<tc>, window_params = [{pipeline_mode = #tpu.pipeline_mode<synchronous>, transform_indices = @transform_0, window_bounds = array<i64: 16, 32>}, {pipeline_mode = #tpu.pipeline_mode<synchronous>, transform_indices = @transform_1, window_bounds = array<i64: 64, 16>}, {pipeline_mode = #tpu.pipeline_mode<synchronous>, transform_indices = @transform_2, window_bounds = array<i64: 2, 32, 64>}, {pipeline_mode = #tpu.pipeline_mode<synchronous>, transform_indices = @transform_3, window_bounds = array<i64: 2, 1, 64>}, {pipeline_mode = #tpu.pipeline_mode<synchronous>, transform_indices = @transform_4, window_bounds = array<i64: 2, 4, 32, 32>}, {pipeline_mode = #tpu.pipeline_mode<synchronous>, transform_indices = @transform_5, window_bounds = array<i64: 2, 32, 64>}, {pipeline_mode = #tpu.pipeline_mode<synchronous>, transform_indices = @transform_6, window_bounds = array<i64: 2, 1, 64>}, {pipeline_mode = #tpu.pipeline_mode<synchronous>, transform_indices = @transform_7, window_bounds = array<i64: 2, 64, 32>}, {pipeline_mode = #tpu.pipeline_mode<synchronous>, transform_indices = @transform_8, window_bounds = array<i64: 2, 6, 1, 32>}, {pipeline_mode = #tpu.pipeline_mode<synchronous>, transform_indices = @transform_9, window_bounds = array<i64: 2, 32, 32>}, {pipeline_mode = #tpu.pipeline_mode<synchronous>, transform_indices = @transform_10, window_bounds = array<i64: 2, 1, 32>}, {pipeline_mode = #tpu.pipeline_mode<synchronous>, transform_indices = @transform_11, window_bounds = array<i64: 16, 32>}]} {
    %c0 = arith.constant 0 : index
    %c0_0 = arith.constant 0 : index
    %0 = vector.load %arg1[%c0, %c0_0] : memref<16x32xf32, #tpu.memory_space<vmem>>, vector<16x32xf32>
    %c0_1 = arith.constant 0 : index
    %c0_2 = arith.constant 0 : index
    %1 = vector.load %arg2[%c0_1, %c0_2] : memref<64x16xf32, #tpu.memory_space<vmem>>, vector<64x16xf32>
    %c0_3 = arith.constant 0 : index
    %c0_4 = arith.constant 0 : index
    %c0_5 = arith.constant 0 : index
    %2 = vector.load %arg3[%c0_3, %c0_4, %c0_5] : memref<2x32x64xf32, #tpu.memory_space<vmem>>, vector<1x32x64xf32>
    %3 = vector.shape_cast %2 : vector<1x32x64xf32> to vector<32x64xf32>
    %cst = arith.constant dense<0.000000e+00> : vector<16x64xf32>
    %4 = tpu.matmul %0, %3, %cst {dimension_numbers = #tpu.dot_dimension_numbers<[1], [0], [0], [1], [0, 0, 1, 1], [], []>} : vector<16x32xf32>, vector<32x64xf32>, vector<16x64xf32> -> vector<16x64xf32>
    %c0_6 = arith.constant 0 : index
    %c0_7 = arith.constant 0 : index
    %c0_8 = arith.constant 0 : index
    %5 = vector.load %arg4[%c0_6, %c0_7, %c0_8] : memref<2x1x64xf32, #tpu.memory_space<vmem>>, vector<1x1x64xf32>
    %6 = vector.shape_cast %5 : vector<1x1x64xf32> to vector<1x64xf32>
    %7 = vector.broadcast %6 : vector<1x64xf32> to vector<16x64xf32>
    %8 = arith.addf %4, %7 : vector<16x64xf32>
    %9 = vector.extract_strided_slice %8 {offsets = [0, 0], sizes = [16, 8], strides = [1, 1]} : vector<16x64xf32> to vector<16x8xf32>
    %10 = vector.extract_strided_slice %8 {offsets = [0, 32], sizes = [16, 8], strides = [1, 1]} : vector<16x64xf32> to vector<16x8xf32>
    %11 = tpu.transpose %10, [1, 0] : vector<16x8xf32> -> vector<8x16xf32>
    %cst_9 = arith.constant dense<0.000000e+00> : vector<16x16xf32>
    %12 = tpu.matmul %9, %11, %cst_9 {dimension_numbers = #tpu.dot_dimension_numbers<[1], [0], [0], [1], [0, 0, 1, 1], [], []>} : vector<16x8xf32>, vector<8x16xf32>, vector<16x16xf32> -> vector<16x16xf32>
    %13 = vector.extract_strided_slice %8 {offsets = [0, 8], sizes = [16, 8], strides = [1, 1]} : vector<16x64xf32> to vector<16x8xf32>
    %14 = vector.extract_strided_slice %8 {offsets = [0, 40], sizes = [16, 8], strides = [1, 1]} : vector<16x64xf32> to vector<16x8xf32>
    %15 = tpu.transpose %14, [1, 0] : vector<16x8xf32> -> vector<8x16xf32>
    %cst_10 = arith.constant dense<0.000000e+00> : vector<16x16xf32>
    %16 = tpu.matmul %13, %15, %cst_10 {dimension_numbers = #tpu.dot_dimension_numbers<[1], [0], [0], [1], [0, 0, 1, 1], [], []>} : vector<16x8xf32>, vector<8x16xf32>, vector<16x16xf32> -> vector<16x16xf32>
    %17 = vector.extract_strided_slice %8 {offsets = [0, 16], sizes = [16, 8], strides = [1, 1]} : vector<16x64xf32> to vector<16x8xf32>
    %18 = vector.extract_strided_slice %8 {offsets = [0, 48], sizes = [16, 8], strides = [1, 1]} : vector<16x64xf32> to vector<16x8xf32>
    %19 = tpu.transpose %18, [1, 0] : vector<16x8xf32> -> vector<8x16xf32>
    %cst_11 = arith.constant dense<0.000000e+00> : vector<16x16xf32>
    %20 = tpu.matmul %17, %19, %cst_11 {dimension_numbers = #tpu.dot_dimension_numbers<[1], [0], [0], [1], [0, 0, 1, 1], [], []>} : vector<16x8xf32>, vector<8x16xf32>, vector<16x16xf32> -> vector<16x16xf32>
    %21 = vector.extract_strided_slice %8 {offsets = [0, 24], sizes = [16, 8], strides = [1, 1]} : vector<16x64xf32> to vector<16x8xf32>
    %22 = vector.extract_strided_slice %8 {offsets = [0, 56], sizes = [16, 8], strides = [1, 1]} : vector<16x64xf32> to vector<16x8xf32>
    %23 = tpu.transpose %22, [1, 0] : vector<16x8xf32> -> vector<8x16xf32>
    %cst_12 = arith.constant dense<0.000000e+00> : vector<16x16xf32>
    %24 = tpu.matmul %21, %23, %cst_12 {dimension_numbers = #tpu.dot_dimension_numbers<[1], [0], [0], [1], [0, 0, 1, 1], [], []>} : vector<16x8xf32>, vector<8x16xf32>, vector<16x16xf32> -> vector<16x16xf32>
    %25 = tpu.concatenate %12, %16, %20, %24 in 0 : vector<16x16xf32>, vector<16x16xf32>, vector<16x16xf32>, vector<16x16xf32> -> vector<64x16xf32>
    %26 = arith.addf %25, %1 : vector<64x16xf32>
    %cst_13 = arith.constant dense<0xFF800000> : vector<64xf32>
    %27 = vector.multi_reduction <maximumf>, %26, %cst_13 [1] : vector<64x16xf32> to vector<64xf32>
    %28 = vector.shape_cast %27 : vector<64xf32> to vector<64x1xf32>
    %29 = vector.broadcast %28 : vector<64x1xf32> to vector<64x16xf32>
    %30 = arith.subf %26, %29 : vector<64x16xf32>
    %31 = math.exp %30 : vector<64x16xf32>
    %cst_14 = arith.constant dense<0.000000e+00> : vector<64xf32>
    %32 = vector.multi_reduction <add>, %31, %cst_14 [1] : vector<64x16xf32> to vector<64xf32>
    %33 = vector.shape_cast %32 : vector<64xf32> to vector<64x1xf32>
    %34 = tpu.reciprocal %33 {approx = true} : vector<64x1xf32> -> vector<64x1xf32>
    %35 = vector.broadcast %34 : vector<64x1xf32> to vector<64x16xf32>
    %36 = arith.mulf %31, %35 : vector<64x16xf32>
    %cst_15 = arith.constant dense<0.000000e+00> : vector<64x32xf32>
    %37 = tpu.matmul %36, %0, %cst_15 {dimension_numbers = #tpu.dot_dimension_numbers<[1], [0], [0], [1], [0, 0, 1, 1], [], []>} : vector<64x16xf32>, vector<16x32xf32>, vector<64x32xf32> -> vector<64x32xf32>
    %38 = vector.extract_strided_slice %37 {offsets = [0, 0], sizes = [16, 32], strides = [1, 1]} : vector<64x32xf32> to vector<16x32xf32>
    %c0_16 = arith.constant 0 : index
    %c0_17 = arith.constant 0 : index
    %c0_18 = arith.constant 0 : index
    %c0_19 = arith.constant 0 : index
    %39 = vector.load %arg5[%c0_16, %c0_17, %c0_18, %c0_19] : memref<2x4x32x32xf32, #tpu.memory_space<vmem>>, vector<1x1x32x32xf32>
    %40 = vector.shape_cast %39 : vector<1x1x32x32xf32> to vector<32x32xf32>
    %cst_20 = arith.constant dense<0.000000e+00> : vector<16x32xf32>
    %41 = tpu.matmul %38, %40, %cst_20 {dimension_numbers = #tpu.dot_dimension_numbers<[1], [0], [0], [1], [0, 0, 1, 1], [], []>} : vector<16x32xf32>, vector<32x32xf32>, vector<16x32xf32> -> vector<16x32xf32>
    %42 = vector.extract_strided_slice %37 {offsets = [16, 0], sizes = [16, 32], strides = [1, 1]} : vector<64x32xf32> to vector<16x32xf32>
    %c0_21 = arith.constant 0 : index
    %c1 = arith.constant 1 : index
    %c0_22 = arith.constant 0 : index
    %c0_23 = arith.constant 0 : index
    %43 = vector.load %arg5[%c0_21, %c1, %c0_22, %c0_23] : memref<2x4x32x32xf32, #tpu.memory_space<vmem>>, vector<1x1x32x32xf32>
    %44 = vector.shape_cast %43 : vector<1x1x32x32xf32> to vector<32x32xf32>
    %cst_24 = arith.constant dense<0.000000e+00> : vector<16x32xf32>
    %45 = tpu.matmul %42, %44, %cst_24 {dimension_numbers = #tpu.dot_dimension_numbers<[1], [0], [0], [1], [0, 0, 1, 1], [], []>} : vector<16x32xf32>, vector<32x32xf32>, vector<16x32xf32> -> vector<16x32xf32>
    %46 = arith.addf %41, %45 : vector<16x32xf32>
    %47 = vector.extract_strided_slice %37 {offsets = [32, 0], sizes = [16, 32], strides = [1, 1]} : vector<64x32xf32> to vector<16x32xf32>
    %c0_25 = arith.constant 0 : index
    %c2 = arith.constant 2 : index
    %c0_26 = arith.constant 0 : index
    %c0_27 = arith.constant 0 : index
    %48 = vector.load %arg5[%c0_25, %c2, %c0_26, %c0_27] : memref<2x4x32x32xf32, #tpu.memory_space<vmem>>, vector<1x1x32x32xf32>
    %49 = vector.shape_cast %48 : vector<1x1x32x32xf32> to vector<32x32xf32>
    %cst_28 = arith.constant dense<0.000000e+00> : vector<16x32xf32>
    %50 = tpu.matmul %47, %49, %cst_28 {dimension_numbers = #tpu.dot_dimension_numbers<[1], [0], [0], [1], [0, 0, 1, 1], [], []>} : vector<16x32xf32>, vector<32x32xf32>, vector<16x32xf32> -> vector<16x32xf32>
    %51 = arith.addf %46, %50 : vector<16x32xf32>
    %52 = vector.extract_strided_slice %37 {offsets = [48, 0], sizes = [16, 32], strides = [1, 1]} : vector<64x32xf32> to vector<16x32xf32>
    %c0_29 = arith.constant 0 : index
    %c3 = arith.constant 3 : index
    %c0_30 = arith.constant 0 : index
    %c0_31 = arith.constant 0 : index
    %53 = vector.load %arg5[%c0_29, %c3, %c0_30, %c0_31] : memref<2x4x32x32xf32, #tpu.memory_space<vmem>>, vector<1x1x32x32xf32>
    %54 = vector.shape_cast %53 : vector<1x1x32x32xf32> to vector<32x32xf32>
    %cst_32 = arith.constant dense<0.000000e+00> : vector<16x32xf32>
    %55 = tpu.matmul %52, %54, %cst_32 {dimension_numbers = #tpu.dot_dimension_numbers<[1], [0], [0], [1], [0, 0, 1, 1], [], []>} : vector<16x32xf32>, vector<32x32xf32>, vector<16x32xf32> -> vector<16x32xf32>
    %56 = arith.addf %51, %55 : vector<16x32xf32>
    %57 = arith.addf %0, %56 : vector<16x32xf32>
    %c0_33 = arith.constant 0 : index
    %c0_34 = arith.constant 0 : index
    %c0_35 = arith.constant 0 : index
    %c0_36 = arith.constant 0 : index
    %58 = vector.load %arg9[%c0_33, %c0_34, %c0_35, %c0_36] : memref<2x6x1x32xf32, #tpu.memory_space<vmem>>, vector<1x1x1x32xf32>
    %59 = vector.shape_cast %58 : vector<1x1x1x32xf32> to vector<1x32xf32>
    %60 = vector.broadcast %59 : vector<1x32xf32> to vector<16x32xf32>
    %61 = arith.addf %57, %60 : vector<16x32xf32>
    %c0_37 = arith.constant 0 : index
    %c1_38 = arith.constant 1 : index
    %c0_39 = arith.constant 0 : index
    %c0_40 = arith.constant 0 : index
    %62 = vector.load %arg9[%c0_37, %c1_38, %c0_39, %c0_40] : memref<2x6x1x32xf32, #tpu.memory_space<vmem>>, vector<1x1x1x32xf32>
    %63 = vector.shape_cast %62 : vector<1x1x1x32xf32> to vector<1x32xf32>
    %c0_41 = arith.constant 0 : index
    %c2_42 = arith.constant 2 : index
    %c0_43 = arith.constant 0 : index
    %c0_44 = arith.constant 0 : index
    %64 = vector.load %arg9[%c0_41, %c2_42, %c0_43, %c0_44] : memref<2x6x1x32xf32, #tpu.memory_space<vmem>>, vector<1x1x1x32xf32>
    %65 = vector.shape_cast %64 : vector<1x1x1x32xf32> to vector<1x32xf32>
    %cst_45 = arith.constant dense<0.000000e+00> : vector<16xf32>
    %66 = vector.multi_reduction <add>, %61, %cst_45 [1] : vector<16x32xf32> to vector<16xf32>
    %67 = vector.shape_cast %66 : vector<16xf32> to vector<16x1xf32>
    %cst_46 = arith.constant 3.200000e+01 : f32
    %68 = vector.broadcast %cst_46 : f32 to vector<16x1xf32>
    %69 = arith.divf %67, %68 : vector<16x1xf32>
    %70 = vector.broadcast %69 : vector<16x1xf32> to vector<16x32xf32>
    %71 = arith.subf %61, %70 : vector<16x32xf32>
    %72 = arith.mulf %71, %71 : vector<16x32xf32>
    %cst_47 = arith.constant dense<0.000000e+00> : vector<16xf32>
    %73 = vector.multi_reduction <add>, %72, %cst_47 [1] : vector<16x32xf32> to vector<16xf32>
    %74 = vector.shape_cast %73 : vector<16xf32> to vector<16x1xf32>
    %cst_48 = arith.constant 3.200000e+01 : f32
    %75 = vector.broadcast %cst_48 : f32 to vector<16x1xf32>
    %76 = arith.divf %74, %75 : vector<16x1xf32>
    %77 = vector.broadcast %69 : vector<16x1xf32> to vector<16x32xf32>
    %78 = arith.subf %61, %77 : vector<16x32xf32>
    %cst_49 = arith.constant 9.99999974E-6 : f32
    %79 = vector.broadcast %cst_49 : f32 to vector<16x1xf32>
    %80 = arith.addf %76, %79 : vector<16x1xf32>
    %81 = math.rsqrt %80 : vector<16x1xf32>
    %82 = vector.broadcast %81 : vector<16x1xf32> to vector<16x32xf32>
    %83 = arith.mulf %78, %82 : vector<16x32xf32>
    %84 = vector.broadcast %63 : vector<1x32xf32> to vector<16x32xf32>
    %85 = arith.mulf %83, %84 : vector<16x32xf32>
    %86 = vector.broadcast %65 : vector<1x32xf32> to vector<16x32xf32>
    %87 = arith.addf %85, %86 : vector<16x32xf32>
    %c0_50 = arith.constant 0 : index
    %c0_51 = arith.constant 0 : index
    %c0_52 = arith.constant 0 : index
    %88 = vector.load %arg6[%c0_50, %c0_51, %c0_52] : memref<2x32x64xf32, #tpu.memory_space<vmem>>, vector<1x32x64xf32>
    %89 = vector.shape_cast %88 : vector<1x32x64xf32> to vector<32x64xf32>
    %cst_53 = arith.constant dense<0.000000e+00> : vector<16x64xf32>
    %90 = tpu.matmul %87, %89, %cst_53 {dimension_numbers = #tpu.dot_dimension_numbers<[1], [0], [0], [1], [0, 0, 1, 1], [], []>} : vector<16x32xf32>, vector<32x64xf32>, vector<16x64xf32> -> vector<16x64xf32>
    %c0_54 = arith.constant 0 : index
    %c0_55 = arith.constant 0 : index
    %c0_56 = arith.constant 0 : index
    %91 = vector.load %arg7[%c0_54, %c0_55, %c0_56] : memref<2x1x64xf32, #tpu.memory_space<vmem>>, vector<1x1x64xf32>
    %92 = vector.shape_cast %91 : vector<1x1x64xf32> to vector<1x64xf32>
    %93 = vector.broadcast %92 : vector<1x64xf32> to vector<16x64xf32>
    %94 = arith.addf %90, %93 : vector<16x64xf32>
    %cst_57 = arith.constant 0.000000e+00 : f32
    %95 = vector.broadcast %cst_57 : f32 to vector<16x64xf32>
    %96 = arith.maximumf %94, %95 : vector<16x64xf32>
    %c0_58 = arith.constant 0 : index
    %c0_59 = arith.constant 0 : index
    %c0_60 = arith.constant 0 : index
    %97 = vector.load %arg8[%c0_58, %c0_59, %c0_60] : memref<2x64x32xf32, #tpu.memory_space<vmem>>, vector<1x64x32xf32>
    %98 = vector.shape_cast %97 : vector<1x64x32xf32> to vector<64x32xf32>
    %cst_61 = arith.constant dense<0.000000e+00> : vector<16x32xf32>
    %99 = tpu.matmul %96, %98, %cst_61 {dimension_numbers = #tpu.dot_dimension_numbers<[1], [0], [0], [1], [0, 0, 1, 1], [], []>} : vector<16x64xf32>, vector<64x32xf32>, vector<16x32xf32> -> vector<16x32xf32>
    %c0_62 = arith.constant 0 : index
    %c3_63 = arith.constant 3 : index
    %c0_64 = arith.constant 0 : index
    %c0_65 = arith.constant 0 : index
    %100 = vector.load %arg9[%c0_62, %c3_63, %c0_64, %c0_65] : memref<2x6x1x32xf32, #tpu.memory_space<vmem>>, vector<1x1x1x32xf32>
    %101 = vector.shape_cast %100 : vector<1x1x1x32xf32> to vector<1x32xf32>
    %102 = vector.broadcast %101 : vector<1x32xf32> to vector<16x32xf32>
    %103 = arith.addf %99, %102 : vector<16x32xf32>
    %104 = arith.addf %87, %103 : vector<16x32xf32>
    %c0_66 = arith.constant 0 : index
    %c4 = arith.constant 4 : index
    %c0_67 = arith.constant 0 : index
    %c0_68 = arith.constant 0 : index
    %105 = vector.load %arg9[%c0_66, %c4, %c0_67, %c0_68] : memref<2x6x1x32xf32, #tpu.memory_space<vmem>>, vector<1x1x1x32xf32>
    %106 = vector.shape_cast %105 : vector<1x1x1x32xf32> to vector<1x32xf32>
    %c0_69 = arith.constant 0 : index
    %c5 = arith.constant 5 : index
    %c0_70 = arith.constant 0 : index
    %c0_71 = arith.constant 0 : index
    %107 = vector.load %arg9[%c0_69, %c5, %c0_70, %c0_71] : memref<2x6x1x32xf32, #tpu.memory_space<vmem>>, vector<1x1x1x32xf32>
    %108 = vector.shape_cast %107 : vector<1x1x1x32xf32> to vector<1x32xf32>
    %cst_72 = arith.constant dense<0.000000e+00> : vector<16xf32>
    %109 = vector.multi_reduction <add>, %104, %cst_72 [1] : vector<16x32xf32> to vector<16xf32>
    %110 = vector.shape_cast %109 : vector<16xf32> to vector<16x1xf32>
    %cst_73 = arith.constant 3.200000e+01 : f32
    %111 = vector.broadcast %cst_73 : f32 to vector<16x1xf32>
    %112 = arith.divf %110, %111 : vector<16x1xf32>
    %113 = vector.broadcast %112 : vector<16x1xf32> to vector<16x32xf32>
    %114 = arith.subf %104, %113 : vector<16x32xf32>
    %115 = arith.mulf %114, %114 : vector<16x32xf32>
    %cst_74 = arith.constant dense<0.000000e+00> : vector<16xf32>
    %116 = vector.multi_reduction <add>, %115, %cst_74 [1] : vector<16x32xf32> to vector<16xf32>
    %117 = vector.shape_cast %116 : vector<16xf32> to vector<16x1xf32>
    %cst_75 = arith.constant 3.200000e+01 : f32
    %118 = vector.broadcast %cst_75 : f32 to vector<16x1xf32>
    %119 = arith.divf %117, %118 : vector<16x1xf32>
    %120 = vector.broadcast %112 : vector<16x1xf32> to vector<16x32xf32>
    %121 = arith.subf %104, %120 : vector<16x32xf32>
    %cst_76 = arith.constant 9.99999974E-6 : f32
    %122 = vector.broadcast %cst_76 : f32 to vector<16x1xf32>
    %123 = arith.addf %119, %122 : vector<16x1xf32>
    %124 = math.rsqrt %123 : vector<16x1xf32>
    %125 = vector.broadcast %124 : vector<16x1xf32> to vector<16x32xf32>
    %126 = arith.mulf %121, %125 : vector<16x32xf32>
    %127 = vector.broadcast %106 : vector<1x32xf32> to vector<16x32xf32>
    %128 = arith.mulf %126, %127 : vector<16x32xf32>
    %129 = vector.broadcast %108 : vector<1x32xf32> to vector<16x32xf32>
    %130 = arith.addf %128, %129 : vector<16x32xf32>
    %c1_77 = arith.constant 1 : index
    %c0_78 = arith.constant 0 : index
    %c0_79 = arith.constant 0 : index
    %131 = vector.load %arg3[%c1_77, %c0_78, %c0_79] : memref<2x32x64xf32, #tpu.memory_space<vmem>>, vector<1x32x64xf32>
    %132 = vector.shape_cast %131 : vector<1x32x64xf32> to vector<32x64xf32>
    %cst_80 = arith.constant dense<0.000000e+00> : vector<16x64xf32>
    %133 = tpu.matmul %130, %132, %cst_80 {dimension_numbers = #tpu.dot_dimension_numbers<[1], [0], [0], [1], [0, 0, 1, 1], [], []>} : vector<16x32xf32>, vector<32x64xf32>, vector<16x64xf32> -> vector<16x64xf32>
    %c1_81 = arith.constant 1 : index
    %c0_82 = arith.constant 0 : index
    %c0_83 = arith.constant 0 : index
    %134 = vector.load %arg4[%c1_81, %c0_82, %c0_83] : memref<2x1x64xf32, #tpu.memory_space<vmem>>, vector<1x1x64xf32>
    %135 = vector.shape_cast %134 : vector<1x1x64xf32> to vector<1x64xf32>
    %136 = vector.broadcast %135 : vector<1x64xf32> to vector<16x64xf32>
    %137 = arith.addf %133, %136 : vector<16x64xf32>
    %138 = vector.extract_strided_slice %137 {offsets = [0, 0], sizes = [16, 8], strides = [1, 1]} : vector<16x64xf32> to vector<16x8xf32>
    %139 = vector.extract_strided_slice %137 {offsets = [0, 32], sizes = [16, 8], strides = [1, 1]} : vector<16x64xf32> to vector<16x8xf32>
    %140 = tpu.transpose %139, [1, 0] : vector<16x8xf32> -> vector<8x16xf32>
    %cst_84 = arith.constant dense<0.000000e+00> : vector<16x16xf32>
    %141 = tpu.matmul %138, %140, %cst_84 {dimension_numbers = #tpu.dot_dimension_numbers<[1], [0], [0], [1], [0, 0, 1, 1], [], []>} : vector<16x8xf32>, vector<8x16xf32>, vector<16x16xf32> -> vector<16x16xf32>
    %142 = vector.extract_strided_slice %137 {offsets = [0, 8], sizes = [16, 8], strides = [1, 1]} : vector<16x64xf32> to vector<16x8xf32>
    %143 = vector.extract_strided_slice %137 {offsets = [0, 40], sizes = [16, 8], strides = [1, 1]} : vector<16x64xf32> to vector<16x8xf32>
    %144 = tpu.transpose %143, [1, 0] : vector<16x8xf32> -> vector<8x16xf32>
    %cst_85 = arith.constant dense<0.000000e+00> : vector<16x16xf32>
    %145 = tpu.matmul %142, %144, %cst_85 {dimension_numbers = #tpu.dot_dimension_numbers<[1], [0], [0], [1], [0, 0, 1, 1], [], []>} : vector<16x8xf32>, vector<8x16xf32>, vector<16x16xf32> -> vector<16x16xf32>
    %146 = vector.extract_strided_slice %137 {offsets = [0, 16], sizes = [16, 8], strides = [1, 1]} : vector<16x64xf32> to vector<16x8xf32>
    %147 = vector.extract_strided_slice %137 {offsets = [0, 48], sizes = [16, 8], strides = [1, 1]} : vector<16x64xf32> to vector<16x8xf32>
    %148 = tpu.transpose %147, [1, 0] : vector<16x8xf32> -> vector<8x16xf32>
    %cst_86 = arith.constant dense<0.000000e+00> : vector<16x16xf32>
    %149 = tpu.matmul %146, %148, %cst_86 {dimension_numbers = #tpu.dot_dimension_numbers<[1], [0], [0], [1], [0, 0, 1, 1], [], []>} : vector<16x8xf32>, vector<8x16xf32>, vector<16x16xf32> -> vector<16x16xf32>
    %150 = vector.extract_strided_slice %137 {offsets = [0, 24], sizes = [16, 8], strides = [1, 1]} : vector<16x64xf32> to vector<16x8xf32>
    %151 = vector.extract_strided_slice %137 {offsets = [0, 56], sizes = [16, 8], strides = [1, 1]} : vector<16x64xf32> to vector<16x8xf32>
    %152 = tpu.transpose %151, [1, 0] : vector<16x8xf32> -> vector<8x16xf32>
    %cst_87 = arith.constant dense<0.000000e+00> : vector<16x16xf32>
    %153 = tpu.matmul %150, %152, %cst_87 {dimension_numbers = #tpu.dot_dimension_numbers<[1], [0], [0], [1], [0, 0, 1, 1], [], []>} : vector<16x8xf32>, vector<8x16xf32>, vector<16x16xf32> -> vector<16x16xf32>
    %154 = tpu.concatenate %141, %145, %149, %153 in 0 : vector<16x16xf32>, vector<16x16xf32>, vector<16x16xf32>, vector<16x16xf32> -> vector<64x16xf32>
    %155 = arith.addf %154, %1 : vector<64x16xf32>
    %cst_88 = arith.constant dense<0xFF800000> : vector<64xf32>
    %156 = vector.multi_reduction <maximumf>, %155, %cst_88 [1] : vector<64x16xf32> to vector<64xf32>
    %157 = vector.shape_cast %156 : vector<64xf32> to vector<64x1xf32>
    %158 = vector.broadcast %157 : vector<64x1xf32> to vector<64x16xf32>
    %159 = arith.subf %155, %158 : vector<64x16xf32>
    %160 = math.exp %159 : vector<64x16xf32>
    %cst_89 = arith.constant dense<0.000000e+00> : vector<64xf32>
    %161 = vector.multi_reduction <add>, %160, %cst_89 [1] : vector<64x16xf32> to vector<64xf32>
    %162 = vector.shape_cast %161 : vector<64xf32> to vector<64x1xf32>
    %163 = tpu.reciprocal %162 {approx = true} : vector<64x1xf32> -> vector<64x1xf32>
    %164 = vector.broadcast %163 : vector<64x1xf32> to vector<64x16xf32>
    %165 = arith.mulf %160, %164 : vector<64x16xf32>
    %cst_90 = arith.constant dense<0.000000e+00> : vector<64x32xf32>
    %166 = tpu.matmul %165, %130, %cst_90 {dimension_numbers = #tpu.dot_dimension_numbers<[1], [0], [0], [1], [0, 0, 1, 1], [], []>} : vector<64x16xf32>, vector<16x32xf32>, vector<64x32xf32> -> vector<64x32xf32>
    %167 = vector.extract_strided_slice %166 {offsets = [0, 0], sizes = [16, 32], strides = [1, 1]} : vector<64x32xf32> to vector<16x32xf32>
    %c1_91 = arith.constant 1 : index
    %c0_92 = arith.constant 0 : index
    %c0_93 = arith.constant 0 : index
    %c0_94 = arith.constant 0 : index
    %168 = vector.load %arg5[%c1_91, %c0_92, %c0_93, %c0_94] : memref<2x4x32x32xf32, #tpu.memory_space<vmem>>, vector<1x1x32x32xf32>
    %169 = vector.shape_cast %168 : vector<1x1x32x32xf32> to vector<32x32xf32>
    %cst_95 = arith.constant dense<0.000000e+00> : vector<16x32xf32>
    %170 = tpu.matmul %167, %169, %cst_95 {dimension_numbers = #tpu.dot_dimension_numbers<[1], [0], [0], [1], [0, 0, 1, 1], [], []>} : vector<16x32xf32>, vector<32x32xf32>, vector<16x32xf32> -> vector<16x32xf32>
    %171 = vector.extract_strided_slice %166 {offsets = [16, 0], sizes = [16, 32], strides = [1, 1]} : vector<64x32xf32> to vector<16x32xf32>
    %c1_96 = arith.constant 1 : index
    %c1_97 = arith.constant 1 : index
    %c0_98 = arith.constant 0 : index
    %c0_99 = arith.constant 0 : index
    %172 = vector.load %arg5[%c1_96, %c1_97, %c0_98, %c0_99] : memref<2x4x32x32xf32, #tpu.memory_space<vmem>>, vector<1x1x32x32xf32>
    %173 = vector.shape_cast %172 : vector<1x1x32x32xf32> to vector<32x32xf32>
    %cst_100 = arith.constant dense<0.000000e+00> : vector<16x32xf32>
    %174 = tpu.matmul %171, %173, %cst_100 {dimension_numbers = #tpu.dot_dimension_numbers<[1], [0], [0], [1], [0, 0, 1, 1], [], []>} : vector<16x32xf32>, vector<32x32xf32>, vector<16x32xf32> -> vector<16x32xf32>
    %175 = arith.addf %170, %174 : vector<16x32xf32>
    %176 = vector.extract_strided_slice %166 {offsets = [32, 0], sizes = [16, 32], strides = [1, 1]} : vector<64x32xf32> to vector<16x32xf32>
    %c1_101 = arith.constant 1 : index
    %c2_102 = arith.constant 2 : index
    %c0_103 = arith.constant 0 : index
    %c0_104 = arith.constant 0 : index
    %177 = vector.load %arg5[%c1_101, %c2_102, %c0_103, %c0_104] : memref<2x4x32x32xf32, #tpu.memory_space<vmem>>, vector<1x1x32x32xf32>
    %178 = vector.shape_cast %177 : vector<1x1x32x32xf32> to vector<32x32xf32>
    %cst_105 = arith.constant dense<0.000000e+00> : vector<16x32xf32>
    %179 = tpu.matmul %176, %178, %cst_105 {dimension_numbers = #tpu.dot_dimension_numbers<[1], [0], [0], [1], [0, 0, 1, 1], [], []>} : vector<16x32xf32>, vector<32x32xf32>, vector<16x32xf32> -> vector<16x32xf32>
    %180 = arith.addf %175, %179 : vector<16x32xf32>
    %181 = vector.extract_strided_slice %166 {offsets = [48, 0], sizes = [16, 32], strides = [1, 1]} : vector<64x32xf32> to vector<16x32xf32>
    %c1_106 = arith.constant 1 : index
    %c3_107 = arith.constant 3 : index
    %c0_108 = arith.constant 0 : index
    %c0_109 = arith.constant 0 : index
    %182 = vector.load %arg5[%c1_106, %c3_107, %c0_108, %c0_109] : memref<2x4x32x32xf32, #tpu.memory_space<vmem>>, vector<1x1x32x32xf32>
    %183 = vector.shape_cast %182 : vector<1x1x32x32xf32> to vector<32x32xf32>
    %cst_110 = arith.constant dense<0.000000e+00> : vector<16x32xf32>
    %184 = tpu.matmul %181, %183, %cst_110 {dimension_numbers = #tpu.dot_dimension_numbers<[1], [0], [0], [1], [0, 0, 1, 1], [], []>} : vector<16x32xf32>, vector<32x32xf32>, vector<16x32xf32> -> vector<16x32xf32>
    %185 = arith.addf %180, %184 : vector<16x32xf32>
    %186 = arith.addf %130, %185 : vector<16x32xf32>
    %c1_111 = arith.constant 1 : index
    %c0_112 = arith.constant 0 : index
    %c0_113 = arith.constant 0 : index
    %c0_114 = arith.constant 0 : index
    %187 = vector.load %arg9[%c1_111, %c0_112, %c0_113, %c0_114] : memref<2x6x1x32xf32, #tpu.memory_space<vmem>>, vector<1x1x1x32xf32>
    %188 = vector.shape_cast %187 : vector<1x1x1x32xf32> to vector<1x32xf32>
    %189 = vector.broadcast %188 : vector<1x32xf32> to vector<16x32xf32>
    %190 = arith.addf %186, %189 : vector<16x32xf32>
    %c1_115 = arith.constant 1 : index
    %c1_116 = arith.constant 1 : index
    %c0_117 = arith.constant 0 : index
    %c0_118 = arith.constant 0 : index
    %191 = vector.load %arg9[%c1_115, %c1_116, %c0_117, %c0_118] : memref<2x6x1x32xf32, #tpu.memory_space<vmem>>, vector<1x1x1x32xf32>
    %192 = vector.shape_cast %191 : vector<1x1x1x32xf32> to vector<1x32xf32>
    %c1_119 = arith.constant 1 : index
    %c2_120 = arith.constant 2 : index
    %c0_121 = arith.constant 0 : index
    %c0_122 = arith.constant 0 : index
    %193 = vector.load %arg9[%c1_119, %c2_120, %c0_121, %c0_122] : memref<2x6x1x32xf32, #tpu.memory_space<vmem>>, vector<1x1x1x32xf32>
    %194 = vector.shape_cast %193 : vector<1x1x1x32xf32> to vector<1x32xf32>
    %cst_123 = arith.constant dense<0.000000e+00> : vector<16xf32>
    %195 = vector.multi_reduction <add>, %190, %cst_123 [1] : vector<16x32xf32> to vector<16xf32>
    %196 = vector.shape_cast %195 : vector<16xf32> to vector<16x1xf32>
    %cst_124 = arith.constant 3.200000e+01 : f32
    %197 = vector.broadcast %cst_124 : f32 to vector<16x1xf32>
    %198 = arith.divf %196, %197 : vector<16x1xf32>
    %199 = vector.broadcast %198 : vector<16x1xf32> to vector<16x32xf32>
    %200 = arith.subf %190, %199 : vector<16x32xf32>
    %201 = arith.mulf %200, %200 : vector<16x32xf32>
    %cst_125 = arith.constant dense<0.000000e+00> : vector<16xf32>
    %202 = vector.multi_reduction <add>, %201, %cst_125 [1] : vector<16x32xf32> to vector<16xf32>
    %203 = vector.shape_cast %202 : vector<16xf32> to vector<16x1xf32>
    %cst_126 = arith.constant 3.200000e+01 : f32
    %204 = vector.broadcast %cst_126 : f32 to vector<16x1xf32>
    %205 = arith.divf %203, %204 : vector<16x1xf32>
    %206 = vector.broadcast %198 : vector<16x1xf32> to vector<16x32xf32>
    %207 = arith.subf %190, %206 : vector<16x32xf32>
    %cst_127 = arith.constant 9.99999974E-6 : f32
    %208 = vector.broadcast %cst_127 : f32 to vector<16x1xf32>
    %209 = arith.addf %205, %208 : vector<16x1xf32>
    %210 = math.rsqrt %209 : vector<16x1xf32>
    %211 = vector.broadcast %210 : vector<16x1xf32> to vector<16x32xf32>
    %212 = arith.mulf %207, %211 : vector<16x32xf32>
    %213 = vector.broadcast %192 : vector<1x32xf32> to vector<16x32xf32>
    %214 = arith.mulf %212, %213 : vector<16x32xf32>
    %215 = vector.broadcast %194 : vector<1x32xf32> to vector<16x32xf32>
    %216 = arith.addf %214, %215 : vector<16x32xf32>
    %c1_128 = arith.constant 1 : index
    %c0_129 = arith.constant 0 : index
    %c0_130 = arith.constant 0 : index
    %217 = vector.load %arg6[%c1_128, %c0_129, %c0_130] : memref<2x32x64xf32, #tpu.memory_space<vmem>>, vector<1x32x64xf32>
    %218 = vector.shape_cast %217 : vector<1x32x64xf32> to vector<32x64xf32>
    %cst_131 = arith.constant dense<0.000000e+00> : vector<16x64xf32>
    %219 = tpu.matmul %216, %218, %cst_131 {dimension_numbers = #tpu.dot_dimension_numbers<[1], [0], [0], [1], [0, 0, 1, 1], [], []>} : vector<16x32xf32>, vector<32x64xf32>, vector<16x64xf32> -> vector<16x64xf32>
    %c1_132 = arith.constant 1 : index
    %c0_133 = arith.constant 0 : index
    %c0_134 = arith.constant 0 : index
    %220 = vector.load %arg7[%c1_132, %c0_133, %c0_134] : memref<2x1x64xf32, #tpu.memory_space<vmem>>, vector<1x1x64xf32>
    %221 = vector.shape_cast %220 : vector<1x1x64xf32> to vector<1x64xf32>
    %222 = vector.broadcast %221 : vector<1x64xf32> to vector<16x64xf32>
    %223 = arith.addf %219, %222 : vector<16x64xf32>
    %cst_135 = arith.constant 0.000000e+00 : f32
    %224 = vector.broadcast %cst_135 : f32 to vector<16x64xf32>
    %225 = arith.maximumf %223, %224 : vector<16x64xf32>
    %c1_136 = arith.constant 1 : index
    %c0_137 = arith.constant 0 : index
    %c0_138 = arith.constant 0 : index
    %226 = vector.load %arg8[%c1_136, %c0_137, %c0_138] : memref<2x64x32xf32, #tpu.memory_space<vmem>>, vector<1x64x32xf32>
    %227 = vector.shape_cast %226 : vector<1x64x32xf32> to vector<64x32xf32>
    %cst_139 = arith.constant dense<0.000000e+00> : vector<16x32xf32>
    %228 = tpu.matmul %225, %227, %cst_139 {dimension_numbers = #tpu.dot_dimension_numbers<[1], [0], [0], [1], [0, 0, 1, 1], [], []>} : vector<16x64xf32>, vector<64x32xf32>, vector<16x32xf32> -> vector<16x32xf32>
    %c1_140 = arith.constant 1 : index
    %c3_141 = arith.constant 3 : index
    %c0_142 = arith.constant 0 : index
    %c0_143 = arith.constant 0 : index
    %229 = vector.load %arg9[%c1_140, %c3_141, %c0_142, %c0_143] : memref<2x6x1x32xf32, #tpu.memory_space<vmem>>, vector<1x1x1x32xf32>
    %230 = vector.shape_cast %229 : vector<1x1x1x32xf32> to vector<1x32xf32>
    %231 = vector.broadcast %230 : vector<1x32xf32> to vector<16x32xf32>
    %232 = arith.addf %228, %231 : vector<16x32xf32>
    %233 = arith.addf %216, %232 : vector<16x32xf32>
    %c1_144 = arith.constant 1 : index
    %c4_145 = arith.constant 4 : index
    %c0_146 = arith.constant 0 : index
    %c0_147 = arith.constant 0 : index
    %234 = vector.load %arg9[%c1_144, %c4_145, %c0_146, %c0_147] : memref<2x6x1x32xf32, #tpu.memory_space<vmem>>, vector<1x1x1x32xf32>
    %235 = vector.shape_cast %234 : vector<1x1x1x32xf32> to vector<1x32xf32>
    %c1_148 = arith.constant 1 : index
    %c5_149 = arith.constant 5 : index
    %c0_150 = arith.constant 0 : index
    %c0_151 = arith.constant 0 : index
    %236 = vector.load %arg9[%c1_148, %c5_149, %c0_150, %c0_151] : memref<2x6x1x32xf32, #tpu.memory_space<vmem>>, vector<1x1x1x32xf32>
    %237 = vector.shape_cast %236 : vector<1x1x1x32xf32> to vector<1x32xf32>
    %cst_152 = arith.constant dense<0.000000e+00> : vector<16xf32>
    %238 = vector.multi_reduction <add>, %233, %cst_152 [1] : vector<16x32xf32> to vector<16xf32>
    %239 = vector.shape_cast %238 : vector<16xf32> to vector<16x1xf32>
    %cst_153 = arith.constant 3.200000e+01 : f32
    %240 = vector.broadcast %cst_153 : f32 to vector<16x1xf32>
    %241 = arith.divf %239, %240 : vector<16x1xf32>
    %242 = vector.broadcast %241 : vector<16x1xf32> to vector<16x32xf32>
    %243 = arith.subf %233, %242 : vector<16x32xf32>
    %244 = arith.mulf %243, %243 : vector<16x32xf32>
    %cst_154 = arith.constant dense<0.000000e+00> : vector<16xf32>
    %245 = vector.multi_reduction <add>, %244, %cst_154 [1] : vector<16x32xf32> to vector<16xf32>
    %246 = vector.shape_cast %245 : vector<16xf32> to vector<16x1xf32>
    %cst_155 = arith.constant 3.200000e+01 : f32
    %247 = vector.broadcast %cst_155 : f32 to vector<16x1xf32>
    %248 = arith.divf %246, %247 : vector<16x1xf32>
    %249 = vector.broadcast %241 : vector<16x1xf32> to vector<16x32xf32>
    %250 = arith.subf %233, %249 : vector<16x32xf32>
    %cst_156 = arith.constant 9.99999974E-6 : f32
    %251 = vector.broadcast %cst_156 : f32 to vector<16x1xf32>
    %252 = arith.addf %248, %251 : vector<16x1xf32>
    %253 = math.rsqrt %252 : vector<16x1xf32>
    %254 = vector.broadcast %253 : vector<16x1xf32> to vector<16x32xf32>
    %255 = arith.mulf %250, %254 : vector<16x32xf32>
    %256 = vector.broadcast %235 : vector<1x32xf32> to vector<16x32xf32>
    %257 = arith.mulf %255, %256 : vector<16x32xf32>
    %258 = vector.broadcast %237 : vector<1x32xf32> to vector<16x32xf32>
    %259 = arith.addf %257, %258 : vector<16x32xf32>
    %c0_157 = arith.constant 0 : index
    %c0_158 = arith.constant 0 : index
    %c0_159 = arith.constant 0 : index
    %260 = vector.load %arg10[%c0_157, %c0_158, %c0_159] : memref<2x32x32xf32, #tpu.memory_space<vmem>>, vector<1x32x32xf32>
    %261 = vector.shape_cast %260 : vector<1x32x32xf32> to vector<32x32xf32>
    %cst_160 = arith.constant dense<0.000000e+00> : vector<16x32xf32>
    %262 = tpu.matmul %259, %261, %cst_160 {dimension_numbers = #tpu.dot_dimension_numbers<[1], [0], [0], [1], [0, 0, 1, 1], [], []>} : vector<16x32xf32>, vector<32x32xf32>, vector<16x32xf32> -> vector<16x32xf32>
    %c0_161 = arith.constant 0 : index
    %c0_162 = arith.constant 0 : index
    %c0_163 = arith.constant 0 : index
    %263 = vector.load %arg11[%c0_161, %c0_162, %c0_163] : memref<2x1x32xf32, #tpu.memory_space<vmem>>, vector<1x1x32xf32>
    %264 = vector.shape_cast %263 : vector<1x1x32xf32> to vector<1x32xf32>
    %265 = vector.broadcast %264 : vector<1x32xf32> to vector<16x32xf32>
    %266 = arith.addf %262, %265 : vector<16x32xf32>
    %cst_164 = arith.constant 0.000000e+00 : f32
    %267 = vector.broadcast %cst_164 : f32 to vector<16x32xf32>
    %268 = arith.cmpf oge, %266, %267 : vector<16x32xf32>
    %cst_165 = arith.constant 1.000000e-01 : f32
    %269 = vector.broadcast %cst_165 : f32 to vector<16x32xf32>
    %270 = arith.mulf %269, %266 : vector<16x32xf32>
    %271 = arith.select %268, %266, %270 : vector<16x32xi1>, vector<16x32xf32>
    %c1_166 = arith.constant 1 : index
    %c0_167 = arith.constant 0 : index
    %c0_168 = arith.constant 0 : index
    %272 = vector.load %arg10[%c1_166, %c0_167, %c0_168] : memref<2x32x32xf32, #tpu.memory_space<vmem>>, vector<1x32x32xf32>
    %273 = vector.shape_cast %272 : vector<1x32x32xf32> to vector<32x32xf32>
    %cst_169 = arith.constant dense<0.000000e+00> : vector<16x32xf32>
    %274 = tpu.matmul %271, %273, %cst_169 {dimension_numbers = #tpu.dot_dimension_numbers<[1], [0], [0], [1], [0, 0, 1, 1], [], []>} : vector<16x32xf32>, vector<32x32xf32>, vector<16x32xf32> -> vector<16x32xf32>
    %c1_170 = arith.constant 1 : index
    %c0_171 = arith.constant 0 : index
    %c0_172 = arith.constant 0 : index
    %275 = vector.load %arg11[%c1_170, %c0_171, %c0_172] : memref<2x1x32xf32, #tpu.memory_space<vmem>>, vector<1x1x32xf32>
    %276 = vector.shape_cast %275 : vector<1x1x32xf32> to vector<1x32xf32>
    %277 = vector.broadcast %276 : vector<1x32xf32> to vector<16x32xf32>
    %278 = arith.addf %274, %277 : vector<16x32xf32>
    %c0_173 = arith.constant 0 : index
    %c0_174 = arith.constant 0 : index
    %279 = vector.load %arg12[%c0_173, %c0_174] : memref<16x32xf32, #tpu.memory_space<vmem>>, vector<16x32xf32>
    tpu.vector_store %arg12[%c0_173, %c0_174], %278 {strides = array<i32>} : memref<16x32xf32, #tpu.memory_space<vmem>>, vector<16x32xf32>,
    return
  }
  func.func @transform_0(%arg0: i32) -> (i32, i32) {
    %c0_i32 = arith.constant 0 : i32
    %c0_i32_0 = arith.constant 0 : i32
    %c0_i32_1 = arith.constant 0 : i32
    return %c0_i32, %c0_i32_0 : i32, i32
  }
  func.func @transform_1(%arg0: i32) -> (i32, i32) {
    %c0_i32 = arith.constant 0 : i32
    %c0_i32_0 = arith.constant 0 : i32
    %c0_i32_1 = arith.constant 0 : i32
    return %c0_i32, %c0_i32_0 : i32, i32
  }
  func.func @transform_2(%arg0: i32) -> (i32, i32, i32) {
    %c0_i32 = arith.constant 0 : i32
    %c0_i32_0 = arith.constant 0 : i32
    %c0_i32_1 = arith.constant 0 : i32
    %c0_i32_2 = arith.constant 0 : i32
    return %c0_i32, %c0_i32_0, %c0_i32_1 : i32, i32, i32
  }
  func.func @transform_3(%arg0: i32) -> (i32, i32, i32) {
    %c0_i32 = arith.constant 0 : i32
    %c0_i32_0 = arith.constant 0 : i32
    %c0_i32_1 = arith.constant 0 : i32
    %c0_i32_2 = arith.constant 0 : i32
    return %c0_i32, %c0_i32_0, %c0_i32_1 : i32, i32, i32
  }
  func.func @transform_4(%arg0: i32) -> (i32, i32, i32, i32) {
    %c0_i32 = arith.constant 0 : i32
    %c0_i32_0 = arith.constant 0 : i32
    %c0_i32_1 = arith.constant 0 : i32
    %c0_i32_2 = arith.constant 0 : i32
    %c0_i32_3 = arith.constant 0 : i32
    return %c0_i32, %c0_i32_0, %c0_i32_1, %c0_i32_2 : i32, i32, i32, i32
  }
  func.func @transform_5(%arg0: i32) -> (i32, i32, i32) {
    %c0_i32 = arith.constant 0 : i32
    %c0_i32_0 = arith.constant 0 : i32
    %c0_i32_1 = arith.constant 0 : i32
    %c0_i32_2 = arith.constant 0 : i32
    return %c0_i32, %c0_i32_0, %c0_i32_1 : i32, i32, i32
  }
  func.func @transform_6(%arg0: i32) -> (i32, i32, i32) {
    %c0_i32 = arith.constant 0 : i32
    %c0_i32_0 = arith.constant 0 : i32
    %c0_i32_1 = arith.constant 0 : i32
    %c0_i32_2 = arith.constant 0 : i32
    return %c0_i32, %c0_i32_0, %c0_i32_1 : i32, i32, i32
  }
  func.func @transform_7(%arg0: i32) -> (i32, i32, i32) {
    %c0_i32 = arith.constant 0 : i32
    %c0_i32_0 = arith.constant 0 : i32
    %c0_i32_1 = arith.constant 0 : i32
    %c0_i32_2 = arith.constant 0 : i32
    return %c0_i32, %c0_i32_0, %c0_i32_1 : i32, i32, i32
  }
  func.func @transform_8(%arg0: i32) -> (i32, i32, i32, i32) {
    %c0_i32 = arith.constant 0 : i32
    %c0_i32_0 = arith.constant 0 : i32
    %c0_i32_1 = arith.constant 0 : i32
    %c0_i32_2 = arith.constant 0 : i32
    %c0_i32_3 = arith.constant 0 : i32
    return %c0_i32, %c0_i32_0, %c0_i32_1, %c0_i32_2 : i32, i32, i32, i32
  }
  func.func @transform_9(%arg0: i32) -> (i32, i32, i32) {
    %c0_i32 = arith.constant 0 : i32
    %c0_i32_0 = arith.constant 0 : i32
    %c0_i32_1 = arith.constant 0 : i32
    %c0_i32_2 = arith.constant 0 : i32
    return %c0_i32, %c0_i32_0, %c0_i32_1 : i32, i32, i32
  }
  func.func @transform_10(%arg0: i32) -> (i32, i32, i32) {
    %c0_i32 = arith.constant 0 : i32
    %c0_i32_0 = arith.constant 0 : i32
    %c0_i32_1 = arith.constant 0 : i32
    %c0_i32_2 = arith.constant 0 : i32
    return %c0_i32, %c0_i32_0, %c0_i32_1 : i32, i32, i32
  }
  func.func @transform_11(%arg0: i32) -> (i32, i32) {
    %c0_i32 = arith.constant 0 : i32
    %c0_i32_0 = arith.constant 0 : i32
    %c0_i32_1 = arith.constant 0 : i32
    return %c0_i32, %c0_i32_0 : i32, i32
  }
}

</mosaic_0001>

<llo_original>
// kernel: tpu_custom_call.1
$region0: #{tpu_custom_call.1}
  #allocation0 [shape = 'u32[]', space=smem, size = 0x4, offset = 0x4, fixed_abs, tag = 'smem constant byte address 0x4 - core index']
  #allocation1 [shape = 'u32[72,128]{1,0:T(1,128)}', space=vmem, size = 0x9000, scoped, tag = 'internal scratch']
  %s0 = inlined_call_operand.vmem [shape: f32[16,32], index: 0, kind: input, shape index: {}]
  %s1 = inlined_call_operand.vmem [shape: f32[64,16], index: 1, kind: input, shape index: {}]
  %s2 = inlined_call_operand.vmem [shape: f32[2,32,64], index: 2, kind: input, shape index: {}]
  %s3 = inlined_call_operand.vmem [shape: f32[2,1,64], index: 3, kind: input, shape index: {}]
  %s4 = inlined_call_operand.hbm [shape: f32[2,4,32,32], index: 4, kind: input, shape index: {}]
  %s5 = inlined_call_operand.vmem [shape: f32[2,32,64], index: 5, kind: input, shape index: {}]
  %s6 = inlined_call_operand.vmem [shape: f32[2,1,64], index: 6, kind: input, shape index: {}]
  %s7 = inlined_call_operand.vmem [shape: f32[2,64,32], index: 7, kind: input, shape index: {}]
  %s8 = inlined_call_operand.hbm [shape: f32[2,6,1,32], index: 8, kind: input, shape index: {}]
  %s9 = inlined_call_operand.vmem [shape: f32[2,32,32], index: 9, kind: input, shape index: {}]
  %s10 = inlined_call_operand.vmem [shape: f32[2,1,32], index: 10, kind: input, shape index: {}]
  %s11 = inlined_call_operand.hbm [shape: f32[16,32], index: 11, kind: output, shape index: {}]
  %s12 = sld [smem:[#allocation0]]
  $region62: #{tpu_custom_call.1} parent=0
    _
  %s14 = ssub.s32 1, %s12
  %s15 = scalar_select 0, %s14, %s12
  $region1: #{tpu_custom_call.1} parent=0
    #allocation2 [shape = 'u8[131072]{0}', space=vmem, size = 0x20000, scoped, tag = 'input window, operand 4, single buffered']
    #allocation3 [shape = 's32[1]{0}', space=sflag, size = 0x4, scoped, tag = 'scoped memory for tpu_custom_call.1']
    #allocation4 [shape = 's32[1]{0}', space=sflag, size = 0x4, scoped, tag = 'scoped memory for tpu_custom_call.1']
    #allocation5 [shape = 'u8[6144]{0}', space=vmem, size = 0x1800, scoped, tag = 'input window, operand 8, single buffered']
    #allocation6 [shape = 's32[1]{0}', space=sflag, size = 0x4, scoped, tag = 'scoped memory for tpu_custom_call.1']
    #allocation7 [shape = 'u8[8192]{0}', space=vmem, size = 0x2000, scoped, tag = 'output window, operand 0, single buffered']
    %16 = vsyncpa [#allocation3], 0
    %17 = vsyncpa [#allocation6], 0
    %18 = vsyncpa [#allocation4], 0
    // Predicated region
    $region2: #{tpu_custom_call.1} parent=1 // pred_check
      _
    $region3: #{tpu_custom_call.1} parent=1 // pred_check_branch
      %20 = sbr.rel (0) target = $region5
    $region4: #{tpu_custom_call.1} parent=1 // pred_region
      _
    $region5: #{tpu_custom_call.1} parent=1 // pred_fallthru
      _
    // Predicated region
    $region6: #{tpu_custom_call.1} parent=1 // pred_check
      _
    $region7: #{tpu_custom_call.1} parent=1 // pred_check_branch
      %22 = sbr.rel (0) target = $region9
    $region8: #{tpu_custom_call.1} parent=1 // pred_region
      _
    $region9: #{tpu_custom_call.1} parent=1 // pred_fallthru
      _
    // Predicated region
    $region10: #{tpu_custom_call.1} parent=1 // pred_check
      _
    $region11: #{tpu_custom_call.1} parent=1 // pred_check_branch
      %24 = sbr.rel (0) target = $region13
    $region12: #{tpu_custom_call.1} parent=1 // pred_region
      _
    $region13: #{tpu_custom_call.1} parent=1 // pred_fallthru
      _
    // Predicated region
    $region14: #{tpu_custom_call.1} parent=1 // pred_check
      _
    $region15: #{tpu_custom_call.1} parent=1 // pred_check_branch
      %26 = sbr.rel (0) target = $region17
    $region16: #{tpu_custom_call.1} parent=1 // pred_region
      _
    $region17: #{tpu_custom_call.1} parent=1 // pred_fallthru
      _
    // Predicated region
    $region18: #{tpu_custom_call.1} parent=1 // pred_check
      _
    $region19: #{tpu_custom_call.1} parent=1 // pred_check_branch
      %28 = sbr.rel (0) target = $region21
    $region20: #{tpu_custom_call.1} parent=1 // pred_region
      %30 = vsyncadd [#allocation3], 0
      %s31 = sshll.u32 %s4, 4
      %s32 = int_to_ptr.hbm [resolvable:$true] %s31
      %s33 = sshll.u32 [#allocation2], 4
      %s34 = int_to_ptr.vmem [resolvable:$true] %s33
      %39 = dma.hbm_to_vmem [thread:$0]  %s32, 4096, %s34, [#allocation3], 128, 128, 8
    $region21: #{tpu_custom_call.1} parent=1 // pred_fallthru
      _
    // Predicated region
    $region22: #{tpu_custom_call.1} parent=1 // pred_check
      _
    $region23: #{tpu_custom_call.1} parent=1 // pred_check_branch
      %41 = sbr.rel (0) target = $region25
    $region24: #{tpu_custom_call.1} parent=1 // pred_region
      _
    $region25: #{tpu_custom_call.1} parent=1 // pred_fallthru
      _
    // Predicated region
    $region26: #{tpu_custom_call.1} parent=1 // pred_check
      _
    $region27: #{tpu_custom_call.1} parent=1 // pred_check_branch
      %43 = sbr.rel (0) target = $region29
    $region28: #{tpu_custom_call.1} parent=1 // pred_region
      _
    $region29: #{tpu_custom_call.1} parent=1 // pred_fallthru
      _
    // Predicated region
    $region30: #{tpu_custom_call.1} parent=1 // pred_check
      _
    $region31: #{tpu_custom_call.1} parent=1 // pred_check_branch
      %45 = sbr.rel (0) target = $region33
    $region32: #{tpu_custom_call.1} parent=1 // pred_region
      _
    $region33: #{tpu_custom_call.1} parent=1 // pred_fallthru
      _
    // Predicated region
    $region34: #{tpu_custom_call.1} parent=1 // pred_check
      _
    $region35: #{tpu_custom_call.1} parent=1 // pred_check_branch
      %47 = sbr.rel (0) target = $region37
    $region36: #{tpu_custom_call.1} parent=1 // pred_region
      %49 = vsyncadd [#allocation6], 0
      %s50 = sshll.u32 %s8, 4
      %s51 = int_to_ptr.hbm [resolvable:$true] %s50
      %s52 = sshll.u32 [#allocation5], 4
      %s53 = int_to_ptr.vmem [resolvable:$true] %s52
      %58 = dma.hbm_to_vmem [thread:$0]  %s51, 192, %s53, [#allocation6], 16, 16, 1
    $region37: #{tpu_custom_call.1} parent=1 // pred_fallthru
      _
    // Predicated region
    $region38: #{tpu_custom_call.1} parent=1 // pred_check
      _
    $region39: #{tpu_custom_call.1} parent=1 // pred_check_branch
      %60 = sbr.rel (0) target = $region41
    $region40: #{tpu_custom_call.1} parent=1 // pred_region
      _
    $region41: #{tpu_custom_call.1} parent=1 // pred_fallthru
      _
    // Predicated region
    $region42: #{tpu_custom_call.1} parent=1 // pred_check
      _
    $region43: #{tpu_custom_call.1} parent=1 // pred_check_branch
      %62 = sbr.rel (0) target = $region45
    $region44: #{tpu_custom_call.1} parent=1 // pred_region
      _
    $region45: #{tpu_custom_call.1} parent=1 // pred_fallthru
      _
    // Predicated region
    $region46: #{tpu_custom_call.1} parent=1 // pred_check
      _
    $region47: #{tpu_custom_call.1} parent=1 // pred_check_branch
      %64 = sbr.rel (0) target = $region49
    $region48: #{tpu_custom_call.1} parent=1 // pred_region
      %66 = dma.done [#allocation3], 4096
    $region49: #{tpu_custom_call.1} parent=1 // pred_fallthru
      _
    // Predicated region
    $region50: #{tpu_custom_call.1} parent=1 // pred_check
      _
    $region51: #{tpu_custom_call.1} parent=1 // pred_check_branch
      %68 = sbr.rel (0) target = $region53
    $region52: #{tpu_custom_call.1} parent=1 // pred_region
      %70 = dma.done [#allocation6], 192
    $region53: #{tpu_custom_call.1} parent=1 // pred_fallthru
      _
    %v71 = vld [vmem:[%s0] sm:$0xff]
    %v72 = vld [vmem:[%s0 + $0x8] sm:$0xff]
    %v73 = vld [vmem:[%s1] sm:$0xff]
    %v74 = vld [vmem:[%s1 + $0x8] sm:$0xff]
    %v75 = vld [vmem:[%s1 + $0x10] sm:$0xff]
    %v76 = vld [vmem:[%s1 + $0x18] sm:$0xff]
    %v77 = vld [vmem:[%s1 + $0x20] sm:$0xff]
    %v78 = vld [vmem:[%s1 + $0x28] sm:$0xff]
    %v79 = vld [vmem:[%s1 + $0x30] sm:$0xff]
    %v80 = vld [vmem:[%s1 + $0x38] sm:$0xff]
    %v81 = vld [vmem:[%s2] sm:$0xff]
    %v82 = vld [vmem:[%s2 + $0x8] sm:$0xff]
    %v83 = vld [vmem:[%s2 + $0x10] sm:$0xff]
    %v84 = vld [vmem:[%s2 + $0x18] sm:$0xff]
    %v85 = vld [vmem:[%s3] sm:$0x1]
    %v87 = vperm.slane %v85, 0
    %vm89 = vcmask 261120
    %v91 = vsel %vm89, %v71, 0
    %v94 = vsel %vm89, %v72, 0
    %96 = vmatpush.msra.mxu0 0.0
    %97 = vmatpush.msra.mxu0 0.0
    %98 = vmatpush.msra.mxu0 0.0
    %99 = vmatpush.msra.mxu0 0.0
    %100 = vmatpush.msra.mxu0 0.0
    %101 = vmatpush.msra.mxu0 0.0
    %102 = vmatpush.msra.mxu0 0.0
    %103 = vmatpush.msra.mxu0 0.0
    %104 = vmatpush.msra.mxu0 0.0
    %105 = vmatpush.msra.mxu0 0.0
    %106 = vmatpush.msra.mxu0 0.0
    %107 = vmatpush.msra.mxu0 0.0
    %108 = vmatpush.msra.mxu0 %v84
    %109 = vmatpush.msra.mxu0 %v83
    %110 = vmatpush.msra.mxu0 %v82
    %111 = vmatpush.msra.mxu0 %v81
    %112 = vmatmul.f32.gmra.mxu0 %v91
    %v113 = vpop.f32.mrf.mxu0
    %v114 = vadd.f32 %v87, %v113
    %115 = vmatmul.f32.gmra.mxu0 %v94
    %v116 = vpop.f32.mrf.mxu0
    %v117 = vadd.f32 %v87, %v116
    %118 = vdwg.mxu0
    %121 = vrot.lane.b32.xlu0 %v114, 96
    %v122 = vpop.permute.xlu0 %121
    %123 = vrot.lane.b32.xlu0 %v117, 96
    %v124 = vpop.permute.xlu0 %123
    %vm125 = vcmask 64512
    %v126 = vsel %vm125, %v114, 0
    %v128 = vsel %vm125, %v117, 0
    %v130 = vsel %vm125, %v122, 0
    %v132 = vsel %vm125, %v124, 0
    %134 = vmatpush.xpose.msra.mxu0 0.0
    %135 = vmatpush.xpose.msra.mxu0 0.0
    %136 = vmatpush.xpose.msra.mxu0 0.0
    %137 = vmatpush.xpose.msra.mxu0 0.0
    %138 = vmatpush.xpose.msra.mxu0 0.0
    %139 = vmatpush.xpose.msra.mxu0 0.0
    %140 = vmatpush.xpose.msra.mxu0 0.0
    %141 = vmatpush.xpose.msra.mxu0 0.0
    %142 = vmatpush.xpose.msra.mxu0 0.0
    %143 = vmatpush.xpose.msra.mxu0 0.0
    %144 = vmatpush.xpose.msra.mxu0 0.0
    %145 = vmatpush.xpose.msra.mxu0 0.0
    %146 = vmatpush.xpose.msra.mxu0 0.0
    %147 = vmatpush.xpose.msra.mxu0 0.0
    %148 = vmatpush.xpose.msra.mxu0 %v132
    %149 = vmatpush.xpose.msra.mxu0 %v130
    %150 = vmatmul.f32.gmra.mxu0 %v126
    %v151 = vpop.f32.mrf.mxu0
    %v152 = vadd.f32 0.0, %v151
    %153 = vmatmul.f32.gmra.mxu0 %v128
    %v154 = vpop.f32.mrf.mxu0
    %v155 = vadd.f32 0.0, %v154
    %156 = vdwg.mxu0
    %157 = vrot.lane.b32.xlu0 %v114, 120
    %v158 = vpop.permute.xlu0 %157
    %159 = vrot.lane.b32.xlu0 %v117, 120
    %v160 = vpop.permute.xlu0 %159
    %161 = vrot.lane.b32.xlu0 %v114, 88
    %v162 = vpop.permute.xlu0 %161
    %163 = vrot.lane.b32.xlu0 %v117, 88
    %v164 = vpop.permute.xlu0 %163
    %v165 = vsel %vm125, %v158, 0
    %v167 = vsel %vm125, %v160, 0
    %v169 = vsel %vm125, %v162, 0
    %v171 = vsel %vm125, %v164, 0
    %173 = vmatpush.xpose.msra.mxu0 0.0
    %174 = vmatpush.xpose.msra.mxu0 0.0
    %175 = vmatpush.xpose.msra.mxu0 0.0
    %176 = vmatpush.xpose.msra.mxu0 0.0
    %177 = vmatpush.xpose.msra.mxu0 0.0
    %178 = vmatpush.xpose.msra.mxu0 0.0
    %179 = vmatpush.xpose.msra.mxu0 0.0
    %180 = vmatpush.xpose.msra.mxu0 0.0
    %181 = vmatpush.xpose.msra.mxu0 0.0
    %182 = vmatpush.xpose.msra.mxu0 0.0
    %183 = vmatpush.xpose.msra.mxu0 0.0
    %184 = vmatpush.xpose.msra.mxu0 0.0
    %185 = vmatpush.xpose.msra.mxu0 0.0
    %186 = vmatpush.xpose.msra.mxu0 0.0
    %187 = vmatpush.xpose.msra.mxu0 %v171
    %188 = vmatpush.xpose.msra.mxu0 %v169
    %189 = vmatmul.f32.gmra.mxu0 %v165
    %v190 = vpop.f32.mrf.mxu0
    %v191 = vadd.f32 0.0, %v190
    %192 = vmatmul.f32.gmra.mxu0 %v167
    %v193 = vpop.f32.mrf.mxu0
    %v194 = vadd.f32 0.0, %v193
    %195 = vdwg.mxu0
    %196 = vrot.lane.b32.xlu0 %v114, 112
    %v197 = vpop.permute.xlu0 %196
    %198 = vrot.lane.b32.xlu0 %v117, 112
    %v199 = vpop.permute.xlu0 %198
    %200 = vrot.lane.b32.xlu0 %v114, 80
    %v201 = vpop.permute.xlu0 %200
    %202 = vrot.lane.b32.xlu0 %v117, 80
    %v203 = vpop.permute.xlu0 %202
    %v204 = vsel %vm125, %v197, 0
    %v206 = vsel %vm125, %v199, 0
    %v208 = vsel %vm125, %v201, 0
    %v210 = vsel %vm125, %v203, 0
    %212 = vmatpush.xpose.msra.mxu0 0.0
    %213 = vmatpush.xpose.msra.mxu0 0.0
    %214 = vmatpush.xpose.msra.mxu0 0.0
    %215 = vmatpush.xpose.msra.mxu0 0.0
    %216 = vmatpush.xpose.msra.mxu0 0.0
    %217 = vmatpush.xpose.msra.mxu0 0.0
    %218 = vmatpush.xpose.msra.mxu0 0.0
    %219 = vmatpush.xpose.msra.mxu0 0.0
    %220 = vmatpush.xpose.msra.mxu0 0.0
    %221 = vmatpush.xpose.msra.mxu0 0.0
    %222 = vmatpush.xpose.msra.mxu0 0.0
    %223 = vmatpush.xpose.msra.mxu0 0.0
    %224 = vmatpush.xpose.msra.mxu0 0.0
    %225 = vmatpush.xpose.msra.mxu0 0.0
    %226 = vmatpush.xpose.msra.mxu0 %v210
    %227 = vmatpush.xpose.msra.mxu0 %v208
    %228 = vmatmul.f32.gmra.mxu0 %v204
    %v229 = vpop.f32.mrf.mxu0
    %v230 = vadd.f32 0.0, %v229
    %231 = vmatmul.f32.gmra.mxu0 %v206
    %v232 = vpop.f32.mrf.mxu0
    %v233 = vadd.f32 0.0, %v232
    %234 = vdwg.mxu0
    %235 = vrot.lane.b32.xlu0 %v114, 104
    %v236 = vpop.permute.xlu0 %235
    %237 = vrot.lane.b32.xlu0 %v117, 104
    %v238 = vpop.permute.xlu0 %237
    %239 = vrot.lane.b32.xlu0 %v114, 72
    %v240 = vpop.permute.xlu0 %239
    %241 = vrot.lane.b32.xlu0 %v117, 72
    %v242 = vpop.permute.xlu0 %241
    %v243 = vsel %vm125, %v236, 0
    %v245 = vsel %vm125, %v238, 0
    %v247 = vsel %vm125, %v240, 0
    %v249 = vsel %vm125, %v242, 0
    %251 = vmatpush.xpose.msra.mxu0 0.0
    %252 = vmatpush.xpose.msra.mxu0 0.0
    %253 = vmatpush.xpose.msra.mxu0 0.0
    %254 = vmatpush.xpose.msra.mxu0 0.0
    %255 = vmatpush.xpose.msra.mxu0 0.0
    %256 = vmatpush.xpose.msra.mxu0 0.0
    %257 = vmatpush.xpose.msra.mxu0 0.0
    %258 = vmatpush.xpose.msra.mxu0 0.0
    %259 = vmatpush.xpose.msra.mxu0 0.0
    %260 = vmatpush.xpose.msra.mxu0 0.0
    %261 = vmatpush.xpose.msra.mxu0 0.0
    %262 = vmatpush.xpose.msra.mxu0 0.0
    %263 = vmatpush.xpose.msra.mxu0 0.0
    %264 = vmatpush.xpose.msra.mxu0 0.0
    %265 = vmatpush.xpose.msra.mxu0 %v249
    %266 = vmatpush.xpose.msra.mxu0 %v247
    %267 = vmatmul.f32.gmra.mxu0 %v243
    %v268 = vpop.f32.mrf.mxu0
    %v269 = vadd.f32 0.0, %v268
    %270 = vmatmul.f32.gmra.mxu0 %v245
    %v271 = vpop.f32.mrf.mxu0
    %v272 = vadd.f32 0.0, %v271
    %273 = vdwg.mxu0
    %v274 = vadd.f32 %v152, %v73
    %v275 = vadd.f32 %v155, %v74
    %v276 = vadd.f32 %v191, %v75
    %v277 = vadd.f32 %v194, %v76
    %v278 = vadd.f32 %v230, %v77
    %v279 = vadd.f32 %v233, %v78
    %v280 = vadd.f32 %v269, %v79
    %v281 = vadd.f32 %v272, %v80
    %vm282 = vcmask 130048
    %v283 = vsel %vm282, %v274, -inf
    %284 = vmax.xlane.f32.xlu0 %v283
    %v285 = vpop.xlane.xlu0 %284
    %v286 = vsel %vm282, %v275, -inf
    %287 = vmax.xlane.f32.xlu0 %v286
    %v288 = vpop.xlane.xlu0 %287
    %v289 = vsel %vm282, %v276, -inf
    %290 = vmax.xlane.f32.xlu0 %v289
    %v291 = vpop.xlane.xlu0 %290
    %v292 = vsel %vm282, %v277, -inf
    %293 = vmax.xlane.f32.xlu0 %v292
    %v294 = vpop.xlane.xlu0 %293
    %v295 = vsel %vm282, %v278, -inf
    %296 = vmax.xlane.f32.xlu0 %v295
    %v297 = vpop.xlane.xlu0 %296
    %v298 = vsel %vm282, %v279, -inf
    %299 = vmax.xlane.f32.xlu0 %v298
    %v300 = vpop.xlane.xlu0 %299
    %v301 = vsel %vm282, %v280, -inf
    %302 = vmax.xlane.f32.xlu0 %v301
    %v303 = vpop.xlane.xlu0 %302
    %v304 = vsel %vm282, %v281, -inf
    %305 = vmax.xlane.f32.xlu0 %v304
    %v306 = vpop.xlane.xlu0 %305
    %v307 = vsub.f32 %v274, %v285
    %v308 = vsub.f32 %v275, %v288
    %v309 = vsub.f32 %v276, %v291
    %v310 = vsub.f32 %v277, %v294
    %v311 = vsub.f32 %v278, %v297
    %v312 = vsub.f32 %v279, %v300
    %v313 = vsub.f32 %v280, %v303
    %v314 = vsub.f32 %v281, %v306
    %v315 = vmul.f32 %v307, 1.442695
    %v316 = vpow.pop %v315
    %v317 = vmul.f32 %v308, 1.442695
    %v318 = vpow.pop %v317
    %v319 = vmul.f32 %v309, 1.442695
    %v320 = vpow.pop %v319
    %v321 = vmul.f32 %v310, 1.442695
    %v322 = vpow.pop %v321
    %v323 = vmul.f32 %v311, 1.442695
    %v324 = vpow.pop %v323
    %v325 = vmul.f32 %v312, 1.442695
    %v326 = vpow.pop %v325
    %v327 = vmul.f32 %v313, 1.442695
    %v328 = vpow.pop %v327
    %v329 = vmul.f32 %v314, 1.442695
    %v330 = vpow.pop %v329
    %v331 = vsel %vm282, %v316, 0.0
    %332 = vadd.xlane.f32.xlu0 %v331
    %v333 = vpop.xlane.xlu0 %332
    %v334 = vsel %vm282, %v318, 0.0
    %335 = vadd.xlane.f32.xlu0 %v334
    %v336 = vpop.xlane.xlu0 %335
    %v337 = vsel %vm282, %v320, 0.0
    %338 = vadd.xlane.f32.xlu0 %v337
    %v339 = vpop.xlane.xlu0 %338
    %v340 = vsel %vm282, %v322, 0.0
    %341 = vadd.xlane.f32.xlu0 %v340
    %v342 = vpop.xlane.xlu0 %341
    %v343 = vsel %vm282, %v324, 0.0
    %344 = vadd.xlane.f32.xlu0 %v343
    %v345 = vpop.xlane.xlu0 %344
    %v346 = vsel %vm282, %v326, 0.0
    %347 = vadd.xlane.f32.xlu0 %v346
    %v348 = vpop.xlane.xlu0 %347
    %v349 = vsel %vm282, %v328, 0.0
    %350 = vadd.xlane.f32.xlu0 %v349
    %v351 = vpop.xlane.xlu0 %350
    %v352 = vsel %vm282, %v330, 0.0
    %353 = vadd.xlane.f32.xlu0 %v352
    %v354 = vpop.xlane.xlu0 %353
    %v355 = vrcp.pop %v333
    %v356 = vrcp.pop %v336
    %v357 = vrcp.pop %v339
    %v358 = vrcp.pop %v342
    %v359 = vrcp.pop %v345
    %v360 = vrcp.pop %v348
    %v361 = vrcp.pop %v351
    %v362 = vrcp.pop %v354
    %v363 = vmul.f32 %v316, %v355
    %v364 = vmul.f32 %v318, %v356
    %v365 = vmul.f32 %v320, %v357
    %v366 = vmul.f32 %v322, %v358
    %v367 = vmul.f32 %v324, %v359
    %v368 = vmul.f32 %v326, %v360
    %v369 = vmul.f32 %v328, %v361
    %v370 = vmul.f32 %v330, %v362
    %v372 = vsel %vm282, %v363, 0
    %v375 = vsel %vm282, %v364, 0
    %v378 = vsel %vm282, %v365, 0
    %v381 = vsel %vm282, %v366, 0
    %v384 = vsel %vm282, %v367, 0
    %v387 = vsel %vm282, %v368, 0
    %v390 = vsel %vm282, %v369, 0
    %v393 = vsel %vm282, %v370, 0
    %395 = vmatpush.msra.mxu0 0.0
    %396 = vmatpush.msra.mxu0 0.0
    %397 = vmatpush.msra.mxu0 0.0
    %398 = vmatpush.msra.mxu0 0.0
    %399 = vmatpush.msra.mxu0 0.0
    %400 = vmatpush.msra.mxu0 0.0
    %401 = vmatpush.msra.mxu0 0.0
    %402 = vmatpush.msra.mxu0 0.0
    %403 = vmatpush.msra.mxu0 0.0
    %404 = vmatpush.msra.mxu0 0.0
    %405 = vmatpush.msra.mxu0 0.0
    %406 = vmatpush.msra.mxu0 0.0
    %407 = vmatpush.msra.mxu0 0.0
    %408 = vmatpush.msra.mxu0 0.0
    %409 = vmatpush.msra.mxu0 %v72
    %410 = vmatpush.msra.mxu0 %v71
    %411 = vmatmul.f32.gmra.mxu0 %v372
    %v412 = vpop.f32.mrf.mxu0
    %v413 = vadd.f32 0.0, %v412
    %414 = vmatmul.f32.gmra.mxu0 %v375
    %v415 = vpop.f32.mrf.mxu0
    %v416 = vadd.f32 0.0, %v415
    %417 = vmatmul.f32.gmra.mxu0 %v378
    %v418 = vpop.f32.mrf.mxu0
    %v419 = vadd.f32 0.0, %v418
    %420 = vmatmul.f32.gmra.mxu0 %v381
    %v421 = vpop.f32.mrf.mxu0
    %v422 = vadd.f32 0.0, %v421
    %423 = vmatmul.f32.gmra.mxu0 %v384
    %v424 = vpop.f32.mrf.mxu0
    %v425 = vadd.f32 0.0, %v424
    %426 = vmatmul.f32.gmra.mxu0 %v387
    %v427 = vpop.f32.mrf.mxu0
    %v428 = vadd.f32 0.0, %v427
    %429 = vmatmul.f32.gmra.mxu0 %v390
    %v430 = vpop.f32.mrf.mxu0
    %v431 = vadd.f32 0.0, %v430
    %432 = vmatmul.f32.gmra.mxu0 %v393
    %v433 = vpop.f32.mrf.mxu0
    %v434 = vadd.f32 0.0, %v433
    %435 = vdwg.mxu0
    %v436 = vld [vmem:[#allocation2] sm:$0xff]
    %v437 = vld [vmem:[#allocation2 + $0x8] sm:$0xff]
    %v438 = vld [vmem:[#allocation2 + $0x10] sm:$0xff]
    %v439 = vld [vmem:[#allocation2 + $0x18] sm:$0xff]
    %s440 = scalar_lea.vmem [#allocation2], 32
    %v441 = vld [vmem:[%s440] sm:$0xff]
    %v442 = vld [vmem:[%s440 + $0x8] sm:$0xff]
    %v443 = vld [vmem:[%s440 + $0x10] sm:$0xff]
    %v444 = vld [vmem:[%s440 + $0x18] sm:$0xff]
    %v446 = vsel %vm89, %v419, 0
    %v449 = vsel %vm89, %v422, 0
    %451 = vmatpush.msra.mxu0 0.0
    %452 = vmatpush.msra.mxu0 0.0
    %453 = vmatpush.msra.mxu0 0.0
    %454 = vmatpush.msra.mxu0 0.0
    %455 = vmatpush.msra.mxu0 0.0
    %456 = vmatpush.msra.mxu0 0.0
    %457 = vmatpush.msra.mxu0 0.0
    %458 = vmatpush.msra.mxu0 0.0
    %459 = vmatpush.msra.mxu0 0.0
    %460 = vmatpush.msra.mxu0 0.0
    %461 = vmatpush.msra.mxu0 0.0
    %462 = vmatpush.msra.mxu0 0.0
    %463 = vmatpush.msra.mxu0 %v444
    %464 = vmatpush.msra.mxu0 %v443
    %465 = vmatpush.msra.mxu0 %v442
    %466 = vmatpush.msra.mxu0 %v441
    %467 = vmatmul.f32.gmra.mxu0 %v446
    %v468 = vpop.f32.mrf.mxu0
    %v469 = vadd.f32 0.0, %v468
    %470 = vmatmul.f32.gmra.mxu0 %v449
    %v471 = vpop.f32.mrf.mxu0
    %v472 = vadd.f32 0.0, %v471
    %473 = vdwg.mxu0
    %v475 = vsel %vm89, %v413, 0
    %v478 = vsel %vm89, %v416, 0
    %480 = vmatpush.msra.mxu0 0.0
    %481 = vmatpush.msra.mxu0 0.0
    %482 = vmatpush.msra.mxu0 0.0
    %483 = vmatpush.msra.mxu0 0.0
    %484 = vmatpush.msra.mxu0 0.0
    %485 = vmatpush.msra.mxu0 0.0
    %486 = vmatpush.msra.mxu0 0.0
    %487 = vmatpush.msra.mxu0 0.0
    %488 = vmatpush.msra.mxu0 0.0
    %489 = vmatpush.msra.mxu0 0.0
    %490 = vmatpush.msra.mxu0 0.0
    %491 = vmatpush.msra.mxu0 0.0
    %492 = vmatpush.msra.mxu0 %v439
    %493 = vmatpush.msra.mxu0 %v438
    %494 = vmatpush.msra.mxu0 %v437
    %495 = vmatpush.msra.mxu0 %v436
    %496 = vmatmul.f32.gmra.mxu0 %v475
    %v497 = vpop.f32.mrf.mxu0
    %v498 = vadd.f32 %v469, %v497
    %499 = vmatmul.f32.gmra.mxu0 %v478
    %v500 = vpop.f32.mrf.mxu0
    %v501 = vadd.f32 %v472, %v500
    %502 = vdwg.mxu0
    %s503 = scalar_lea.vmem [#allocation2], 64
    %v504 = vld [vmem:[%s503] sm:$0xff]
    %v505 = vld [vmem:[%s503 + $0x8] sm:$0xff]
    %v506 = vld [vmem:[%s503 + $0x10] sm:$0xff]
    %v507 = vld [vmem:[%s503 + $0x18] sm:$0xff]
    %v509 = vsel %vm89, %v425, 0
    %v512 = vsel %vm89, %v428, 0
    %514 = vmatpush.msra.mxu0 0.0
    %515 = vmatpush.msra.mxu0 0.0
    %516 = vmatpush.msra.mxu0 0.0
    %517 = vmatpush.msra.mxu0 0.0
    %518 = vmatpush.msra.mxu0 0.0
    %519 = vmatpush.msra.mxu0 0.0
    %520 = vmatpush.msra.mxu0 0.0
    %521 = vmatpush.msra.mxu0 0.0
    %522 = vmatpush.msra.mxu0 0.0
    %523 = vmatpush.msra.mxu0 0.0
    %524 = vmatpush.msra.mxu0 0.0
    %525 = vmatpush.msra.mxu0 0.0
    %526 = vmatpush.msra.mxu0 %v507
    %527 = vmatpush.msra.mxu0 %v506
    %528 = vmatpush.msra.mxu0 %v505
    %529 = vmatpush.msra.mxu0 %v504
    %530 = vmatmul.f32.gmra.mxu0 %v509
    %v531 = vpop.f32.mrf.mxu0
    %v532 = vadd.f32 0.0, %v531
    %533 = vmatmul.f32.gmra.mxu0 %v512
    %v534 = vpop.f32.mrf.mxu0
    %v535 = vadd.f32 0.0, %v534
    %536 = vdwg.mxu0
    %v537 = vadd.f32 %v498, %v532
    %v538 = vadd.f32 %v501, %v535
    %s539 = scalar_lea.vmem [#allocation2], 96
    %v540 = vld [vmem:[%s539] sm:$0xff]
    %v541 = vld [vmem:[%s539 + $0x8] sm:$0xff]
    %v542 = vld [vmem:[%s539 + $0x10] sm:$0xff]
    %v543 = vld [vmem:[%s539 + $0x18] sm:$0xff]
    %v545 = vsel %vm89, %v431, 0
    %v548 = vsel %vm89, %v434, 0
    %550 = vmatpush.msra.mxu0 0.0
    %551 = vmatpush.msra.mxu0 0.0
    %552 = vmatpush.msra.mxu0 0.0
    %553 = vmatpush.msra.mxu0 0.0
    %554 = vmatpush.msra.mxu0 0.0
    %555 = vmatpush.msra.mxu0 0.0
    %556 = vmatpush.msra.mxu0 0.0
    %557 = vmatpush.msra.mxu0 0.0
    %558 = vmatpush.msra.mxu0 0.0
    %559 = vmatpush.msra.mxu0 0.0
    %560 = vmatpush.msra.mxu0 0.0
    %561 = vmatpush.msra.mxu0 0.0
    %562 = vmatpush.msra.mxu0 %v543
    %563 = vmatpush.msra.mxu0 %v542
    %564 = vmatpush.msra.mxu0 %v541
    %565 = vmatpush.msra.mxu0 %v540
    %566 = vmatmul.f32.gmra.mxu0 %v545
    %v567 = vpop.f32.mrf.mxu0
    %v568 = vadd.f32 0.0, %v567
    %569 = vmatmul.f32.gmra.mxu0 %v548
    %v570 = vpop.f32.mrf.mxu0
    %v571 = vadd.f32 0.0, %v570
    %572 = vdwg.mxu0
    %v573 = vadd.f32 %v537, %v568
    %v574 = vadd.f32 %v538, %v571
    %v575 = vadd.f32 %v71, %v573
    %v576 = vadd.f32 %v72, %v574
    %v577 = vld [vmem:[#allocation5] sm:$0x1]
    %v579 = vperm.slane %v577, 0
    %v581 = vadd.f32 %v575, %v579
    %v582 = vadd.f32 %v576, %v579
    %s583 = scalar_lea.vmem [#allocation5], 1
    %v584 = vld [vmem:[%s583] sm:$0x1]
    %s585 = scalar_lea.vmem [#allocation5], 2
    %v586 = vld [vmem:[%s585] sm:$0x1]
    %v587 = vsel %vm89, %v581, 0.0
    %588 = vadd.xlane.f32.xlu0 %v587
    %v589 = vpop.xlane.xlu0 %588
    %v590 = vsel %vm89, %v582, 0.0
    %591 = vadd.xlane.f32.xlu0 %v590
    %v592 = vpop.xlane.xlu0 %591
    %v593 = vrcp.pop 32.0
    %v594 = vmul.f32 32.0, %v593
    %v595 = vsub.f32 1.0, %v594
    %v596 = vmul.f32 %v593, %v595
    %v597 = vadd.f32 %v593, %v596
    %vm598 = vweird.f32 %v593
    %v599 = vsel %vm598, %v593, %v597
    %v600 = vmul.f32 %v589, %v599
    %v601 = vmul.f32 %v592, %v599
    %v602 = vsub.f32 %v581, %v600
    %v603 = vsub.f32 %v582, %v601
    %v604 = vmul.f32 %v602, %v602
    %v605 = vmul.f32 %v603, %v603
    %v606 = vsel %vm89, %v604, 0.0
    %607 = vadd.xlane.f32.xlu0 %v606
    %v608 = vpop.xlane.xlu0 %607
    %v609 = vsel %vm89, %v605, 0.0
    %610 = vadd.xlane.f32.xlu0 %v609
    %v611 = vpop.xlane.xlu0 %610
    %v612 = vmul.f32 %v608, %v599
    %v613 = vmul.f32 %v611, %v599
    %v614 = vadd.f32 %v612, 1e-05
    %v615 = vadd.f32 %v613, 1e-05
    %v616 = vrsqrt.pop %v614
    %v617 = vmul.f32 %v616, %v614
    %v618 = vmul.f32 %v617, %v616
    %v619 = vmul.f32 0.5, %v618
    %v620 = vsub.f32 1.5, %v619
    %v621 = vmul.f32 %v616, %v620
    %vm622 = vweird.f32 %v614
    %vm623 = vweird.f32 %v616
    %vm624 = vmor %vm622, %vm623
    %v625 = vsel %vm624, %v616, %v621
    %v626 = vrsqrt.pop %v615
    %v627 = vmul.f32 %v626, %v615
    %v628 = vmul.f32 %v627, %v626
    %v629 = vmul.f32 0.5, %v628
    %v630 = vsub.f32 1.5, %v629
    %v631 = vmul.f32 %v626, %v630
    %vm632 = vweird.f32 %v615
    %vm633 = vweird.f32 %v626
    %vm634 = vmor %vm632, %vm633
    %v635 = vsel %vm634, %v626, %v631
    %v636 = vmul.f32 %v602, %v625
    %v637 = vmul.f32 %v603, %v635
    %v639 = vperm.slane %v584, 0
    %v641 = vmul.f32 %v636, %v639
    %v642 = vmul.f32 %v637, %v639
    %v644 = vperm.slane %v586, 0
    %v646 = vadd.f32 %v641, %v644
    %v647 = vadd.f32 %v642, %v644
    %v648 = vld [vmem:[%s5] sm:$0xff]
    %v649 = vld [vmem:[%s5 + $0x8] sm:$0xff]
    %v650 = vld [vmem:[%s5 + $0x10] sm:$0xff]
    %v651 = vld [vmem:[%s5 + $0x18] sm:$0xff]
    %v652 = vld [vmem:[%s6] sm:$0x1]
    %v654 = vperm.slane %v652, 0
    %v657 = vsel %vm89, %v646, 0
    %v660 = vsel %vm89, %v647, 0
    %662 = vmatpush.msra.mxu0 0.0
    %663 = vmatpush.msra.mxu0 0.0
    %664 = vmatpush.msra.mxu0 0.0
    %665 = vmatpush.msra.mxu0 0.0
    %666 = vmatpush.msra.mxu0 0.0
    %667 = vmatpush.msra.mxu0 0.0
    %668 = vmatpush.msra.mxu0 0.0
    %669 = vmatpush.msra.mxu0 0.0
    %670 = vmatpush.msra.mxu0 0.0
    %671 = vmatpush.msra.mxu0 0.0
    %672 = vmatpush.msra.mxu0 0.0
    %673 = vmatpush.msra.mxu0 0.0
    %674 = vmatpush.msra.mxu0 %v651
    %675 = vmatpush.msra.mxu0 %v650
    %676 = vmatpush.msra.mxu0 %v649
    %677 = vmatpush.msra.mxu0 %v648
    %678 = vmatmul.f32.gmra.mxu0 %v657
    %v679 = vpop.f32.mrf.mxu0
    %v680 = vadd.f32 %v654, %v679
    %681 = vmatmul.f32.gmra.mxu0 %v660
    %v682 = vpop.f32.mrf.mxu0
    %v683 = vadd.f32 %v654, %v682
    %684 = vdwg.mxu0
    %v685 = vmax.f32 %v680, 0.0
    %v686 = vmax.f32 %v683, 0.0
    %v687 = vld [vmem:[%s7] sm:$0xff]
    %v688 = vld [vmem:[%s7 + $0x8] sm:$0xff]
    %v689 = vld [vmem:[%s7 + $0x10] sm:$0xff]
    %v690 = vld [vmem:[%s7 + $0x18] sm:$0xff]
    %v691 = vld [vmem:[%s7 + $0x20] sm:$0xff]
    %v692 = vld [vmem:[%s7 + $0x28] sm:$0xff]
    %v693 = vld [vmem:[%s7 + $0x30] sm:$0xff]
    %v694 = vld [vmem:[%s7 + $0x38] sm:$0xff]
    %s695 = scalar_lea.vmem [#allocation5], 3
    %v696 = vld [vmem:[%s695] sm:$0x1]
    %v698 = vperm.slane %v696, 0
    %vm700 = vcmask 523264
    %v702 = vsel %vm700, %v685, 0
    %v705 = vsel %vm700, %v686, 0
    %707 = vmatpush.msra.mxu0 0.0
    %708 = vmatpush.msra.mxu0 0.0
    %709 = vmatpush.msra.mxu0 0.0
    %710 = vmatpush.msra.mxu0 0.0
    %711 = vmatpush.msra.mxu0 0.0
    %712 = vmatpush.msra.mxu0 0.0
    %713 = vmatpush.msra.mxu0 0.0
    %714 = vmatpush.msra.mxu0 0.0
    %715 = vmatpush.msra.mxu0 %v694
    %716 = vmatpush.msra.mxu0 %v693
    %717 = vmatpush.msra.mxu0 %v692
    %718 = vmatpush.msra.mxu0 %v691
    %719 = vmatpush.msra.mxu0 %v690
    %720 = vmatpush.msra.mxu0 %v689
    %721 = vmatpush.msra.mxu0 %v688
    %722 = vmatpush.msra.mxu0 %v687
    %723 = vmatmul.f32.gmra.mxu0 %v702
    %v724 = vpop.f32.mrf.mxu0
    %v725 = vadd.f32 %v698, %v724
    %726 = vmatmul.f32.gmra.mxu0 %v705
    %v727 = vpop.f32.mrf.mxu0
    %v728 = vadd.f32 %v698, %v727
    %729 = vdwg.mxu0
    %v730 = vadd.f32 %v646, %v725
    %v731 = vadd.f32 %v647, %v728
    %s732 = scalar_lea.vmem [#allocation5], 4
    %v733 = vld [vmem:[%s732] sm:$0x1]
    %s734 = scalar_lea.vmem [#allocation5], 5
    %v735 = vld [vmem:[%s734] sm:$0x1]
    %v736 = vsel %vm89, %v730, 0.0
    %737 = vadd.xlane.f32.xlu0 %v736
    %v738 = vpop.xlane.xlu0 %737
    %v739 = vsel %vm89, %v731, 0.0
    %740 = vadd.xlane.f32.xlu0 %v739
    %v741 = vpop.xlane.xlu0 %740
    %v742 = vmul.f32 %v738, %v599
    %v743 = vmul.f32 %v741, %v599
    %v744 = vsub.f32 %v730, %v742
    %v745 = vsub.f32 %v731, %v743
    %v746 = vmul.f32 %v744, %v744
    %v747 = vmul.f32 %v745, %v745
    %v748 = vsel %vm89, %v746, 0.0
    %749 = vadd.xlane.f32.xlu0 %v748
    %v750 = vpop.xlane.xlu0 %749
    %v751 = vsel %vm89, %v747, 0.0
    %752 = vadd.xlane.f32.xlu0 %v751
    %v753 = vpop.xlane.xlu0 %752
    %v754 = vmul.f32 %v750, %v599
    %v755 = vmul.f32 %v753, %v599
    %v756 = vadd.f32 %v754, 1e-05
    %v757 = vadd.f32 %v755, 1e-05
    %v758 = vrsqrt.pop %v756
    %v759 = vmul.f32 %v758, %v756
    %v760 = vmul.f32 %v759, %v758
    %v761 = vmul.f32 0.5, %v760
    %v762 = vsub.f32 1.5, %v761
    %v763 = vmul.f32 %v758, %v762
    %vm764 = vweird.f32 %v756
    %vm765 = vweird.f32 %v758
    %vm766 = vmor %vm764, %vm765
    %v767 = vsel %vm766, %v758, %v763
    %v768 = vrsqrt.pop %v757
    %v769 = vmul.f32 %v768, %v757
    %v770 = vmul.f32 %v769, %v768
    %v771 = vmul.f32 0.5, %v770
    %v772 = vsub.f32 1.5, %v771
    %v773 = vmul.f32 %v768, %v772
    %vm774 = vweird.f32 %v757
    %vm775 = vweird.f32 %v768
    %vm776 = vmor %vm774, %vm775
    %v777 = vsel %vm776, %v768, %v773
    %v778 = vmul.f32 %v744, %v767
    %v779 = vmul.f32 %v745, %v777
    %v781 = vperm.slane %v733, 0
    %v783 = vmul.f32 %v778, %v781
    %v784 = vmul.f32 %v779, %v781
    %v786 = vperm.slane %v735, 0
    %v788 = vadd.f32 %v783, %v786
    %v789 = vadd.f32 %v784, %v786
    %s790 = scalar_lea.vmem %s2, 32
    %v791 = vld [vmem:[%s790] sm:$0xff]
    %v792 = vld [vmem:[%s790 + $0x8] sm:$0xff]
    %v793 = vld [vmem:[%s790 + $0x10] sm:$0xff]
    %v794 = vld [vmem:[%s790 + $0x18] sm:$0xff]
    %s795 = scalar_lea.vmem %s3, 1
    %v796 = vld [vmem:[%s795] sm:$0x1]
    %v798 = vperm.slane %v796, 0
    %v801 = vsel %vm89, %v788, 0
    %v804 = vsel %vm89, %v789, 0
    %806 = vmatpush.msra.mxu0 0.0
    %807 = vmatpush.msra.mxu0 0.0
    %808 = vmatpush.msra.mxu0 0.0
    %809 = vmatpush.msra.mxu0 0.0
    %810 = vmatpush.msra.mxu0 0.0
    %811 = vmatpush.msra.mxu0 0.0
    %812 = vmatpush.msra.mxu0 0.0
    %813 = vmatpush.msra.mxu0 0.0
    %814 = vmatpush.msra.mxu0 0.0
    %815 = vmatpush.msra.mxu0 0.0
    %816 = vmatpush.msra.mxu0 0.0
    %817 = vmatpush.msra.mxu0 0.0
    %818 = vmatpush.msra.mxu0 %v794
    %819 = vmatpush.msra.mxu0 %v793
    %820 = vmatpush.msra.mxu0 %v792
    %821 = vmatpush.msra.mxu0 %v791
    %822 = vmatmul.f32.gmra.mxu0 %v801
    %v823 = vpop.f32.mrf.mxu0
    %v824 = vadd.f32 %v798, %v823
    %825 = vmatmul.f32.gmra.mxu0 %v804
    %v826 = vpop.f32.mrf.mxu0
    %v827 = vadd.f32 %v798, %v826
    %828 = vdwg.mxu0
    %831 = vrot.lane.b32.xlu0 %v824, 96
    %v832 = vpop.permute.xlu0 %831
    %833 = vrot.lane.b32.xlu0 %v827, 96
    %v834 = vpop.permute.xlu0 %833
    %v835 = vsel %vm125, %v824, 0
    %v837 = vsel %vm125, %v827, 0
    %v839 = vsel %vm125, %v832, 0
    %v841 = vsel %vm125, %v834, 0
    %843 = vmatpush.xpose.msra.mxu0 0.0
    %844 = vmatpush.xpose.msra.mxu0 0.0
    %845 = vmatpush.xpose.msra.mxu0 0.0
    %846 = vmatpush.xpose.msra.mxu0 0.0
    %847 = vmatpush.xpose.msra.mxu0 0.0
    %848 = vmatpush.xpose.msra.mxu0 0.0
    %849 = vmatpush.xpose.msra.mxu0 0.0
    %850 = vmatpush.xpose.msra.mxu0 0.0
    %851 = vmatpush.xpose.msra.mxu0 0.0
    %852 = vmatpush.xpose.msra.mxu0 0.0
    %853 = vmatpush.xpose.msra.mxu0 0.0
    %854 = vmatpush.xpose.msra.mxu0 0.0
    %855 = vmatpush.xpose.msra.mxu0 0.0
    %856 = vmatpush.xpose.msra.mxu0 0.0
    %857 = vmatpush.xpose.msra.mxu0 %v841
    %858 = vmatpush.xpose.msra.mxu0 %v839
    %859 = vmatmul.f32.gmra.mxu0 %v835
    %v860 = vpop.f32.mrf.mxu0
    %v861 = vadd.f32 0.0, %v860
    %862 = vmatmul.f32.gmra.mxu0 %v837
    %v863 = vpop.f32.mrf.mxu0
    %v864 = vadd.f32 0.0, %v863
    %865 = vdwg.mxu0
    %866 = vrot.lane.b32.xlu0 %v824, 120
    %v867 = vpop.permute.xlu0 %866
    %868 = vrot.lane.b32.xlu0 %v827, 120
    %v869 = vpop.permute.xlu0 %868
    %870 = vrot.lane.b32.xlu0 %v824, 88
    %v871 = vpop.permute.xlu0 %870
    %872 = vrot.lane.b32.xlu0 %v827, 88
    %v873 = vpop.permute.xlu0 %872
    %v874 = vsel %vm125, %v867, 0
    %v876 = vsel %vm125, %v869, 0
    %v878 = vsel %vm125, %v871, 0
    %v880 = vsel %vm125, %v873, 0
    %882 = vmatpush.xpose.msra.mxu0 0.0
    %883 = vmatpush.xpose.msra.mxu0 0.0
    %884 = vmatpush.xpose.msra.mxu0 0.0
    %885 = vmatpush.xpose.msra.mxu0 0.0
    %886 = vmatpush.xpose.msra.mxu0 0.0
    %887 = vmatpush.xpose.msra.mxu0 0.0
    %888 = vmatpush.xpose.msra.mxu0 0.0
    %889 = vmatpush.xpose.msra.mxu0 0.0
    %890 = vmatpush.xpose.msra.mxu0 0.0
    %891 = vmatpush.xpose.msra.mxu0 0.0
    %892 = vmatpush.xpose.msra.mxu0 0.0
    %893 = vmatpush.xpose.msra.mxu0 0.0
    %894 = vmatpush.xpose.msra.mxu0 0.0
    %895 = vmatpush.xpose.msra.mxu0 0.0
    %896 = vmatpush.xpose.msra.mxu0 %v880
    %897 = vmatpush.xpose.msra.mxu0 %v878
    %898 = vmatmul.f32.gmra.mxu0 %v874
    %v899 = vpop.f32.mrf.mxu0
    %v900 = vadd.f32 0.0, %v899
    %901 = vmatmul.f32.gmra.mxu0 %v876
    %v902 = vpop.f32.mrf.mxu0
    %v903 = vadd.f32 0.0, %v902
    %904 = vdwg.mxu0
    %905 = vrot.lane.b32.xlu0 %v824, 112
    %v906 = vpop.permute.xlu0 %905
    %907 = vrot.lane.b32.xlu0 %v827, 112
    %v908 = vpop.permute.xlu0 %907
    %909 = vrot.lane.b32.xlu0 %v824, 80
    %v910 = vpop.permute.xlu0 %909
    %911 = vrot.lane.b32.xlu0 %v827, 80
    %v912 = vpop.permute.xlu0 %911
    %v913 = vsel %vm125, %v906, 0
    %v915 = vsel %vm125, %v908, 0
    %v917 = vsel %vm125, %v910, 0
    %v919 = vsel %vm125, %v912, 0
    %921 = vmatpush.xpose.msra.mxu0 0.0
    %922 = vmatpush.xpose.msra.mxu0 0.0
    %923 = vmatpush.xpose.msra.mxu0 0.0
    %924 = vmatpush.xpose.msra.mxu0 0.0
    %925 = vmatpush.xpose.msra.mxu0 0.0
    %926 = vmatpush.xpose.msra.mxu0 0.0
    %927 = vmatpush.xpose.msra.mxu0 0.0
    %928 = vmatpush.xpose.msra.mxu0 0.0
    %929 = vmatpush.xpose.msra.mxu0 0.0
    %930 = vmatpush.xpose.msra.mxu0 0.0
    %931 = vmatpush.xpose.msra.mxu0 0.0
    %932 = vmatpush.xpose.msra.mxu0 0.0
    %933 = vmatpush.xpose.msra.mxu0 0.0
    %934 = vmatpush.xpose.msra.mxu0 0.0
    %935 = vmatpush.xpose.msra.mxu0 %v919
    %936 = vmatpush.xpose.msra.mxu0 %v917
    %937 = vmatmul.f32.gmra.mxu0 %v913
    %v938 = vpop.f32.mrf.mxu0
    %v939 = vadd.f32 0.0, %v938
    %940 = vmatmul.f32.gmra.mxu0 %v915
    %v941 = vpop.f32.mrf.mxu0
    %v942 = vadd.f32 0.0, %v941
    %943 = vdwg.mxu0
    %944 = vrot.lane.b32.xlu0 %v824, 104
    %v945 = vpop.permute.xlu0 %944
    %946 = vrot.lane.b32.xlu0 %v827, 104
    %v947 = vpop.permute.xlu0 %946
    %948 = vrot.lane.b32.xlu0 %v824, 72
    %v949 = vpop.permute.xlu0 %948
    %950 = vrot.lane.b32.xlu0 %v827, 72
    %v951 = vpop.permute.xlu0 %950
    %v952 = vsel %vm125, %v945, 0
    %v954 = vsel %vm125, %v947, 0
    %v956 = vsel %vm125, %v949, 0
    %v958 = vsel %vm125, %v951, 0
    %960 = vmatpush.xpose.msra.mxu0 0.0
    %961 = vmatpush.xpose.msra.mxu0 0.0
    %962 = vmatpush.xpose.msra.mxu0 0.0
    %963 = vmatpush.xpose.msra.mxu0 0.0
    %964 = vmatpush.xpose.msra.mxu0 0.0
    %965 = vmatpush.xpose.msra.mxu0 0.0
    %966 = vmatpush.xpose.msra.mxu0 0.0
    %967 = vmatpush.xpose.msra.mxu0 0.0
    %968 = vmatpush.xpose.msra.mxu0 0.0
    %969 = vmatpush.xpose.msra.mxu0 0.0
    %970 = vmatpush.xpose.msra.mxu0 0.0
    %971 = vmatpush.xpose.msra.mxu0 0.0
    %972 = vmatpush.xpose.msra.mxu0 0.0
    %973 = vmatpush.xpose.msra.mxu0 0.0
    %974 = vmatpush.xpose.msra.mxu0 %v958
    %975 = vmatpush.xpose.msra.mxu0 %v956
    %976 = vmatmul.f32.gmra.mxu0 %v952
    %v977 = vpop.f32.mrf.mxu0
    %v978 = vadd.f32 0.0, %v977
    %979 = vmatmul.f32.gmra.mxu0 %v954
    %v980 = vpop.f32.mrf.mxu0
    %v981 = vadd.f32 0.0, %v980
    %982 = vdwg.mxu0
    %v983 = vadd.f32 %v861, %v73
    %v984 = vadd.f32 %v864, %v74
    %v985 = vadd.f32 %v900, %v75
    %v986 = vadd.f32 %v903, %v76
    %v987 = vadd.f32 %v939, %v77
    %v988 = vadd.f32 %v942, %v78
    %v989 = vadd.f32 %v978, %v79
    %v990 = vadd.f32 %v981, %v80
    %v991 = vsel %vm282, %v983, -inf
    %992 = vmax.xlane.f32.xlu0 %v991
    %v993 = vpop.xlane.xlu0 %992
    %v994 = vsel %vm282, %v984, -inf
    %995 = vmax.xlane.f32.xlu0 %v994
    %v996 = vpop.xlane.xlu0 %995
    %v997 = vsel %vm282, %v985, -inf
    %998 = vmax.xlane.f32.xlu0 %v997
    %v999 = vpop.xlane.xlu0 %998
    %v1000 = vsel %vm282, %v986, -inf
    %1001 = vmax.xlane.f32.xlu0 %v1000
    %v1002 = vpop.xlane.xlu0 %1001
    %v1003 = vsel %vm282, %v987, -inf
    %1004 = vmax.xlane.f32.xlu0 %v1003
    %v1005 = vpop.xlane.xlu0 %1004
    %v1006 = vsel %vm282, %v988, -inf
    %1007 = vmax.xlane.f32.xlu0 %v1006
    %v1008 = vpop.xlane.xlu0 %1007
    %v1009 = vsel %vm282, %v989, -inf
    %1010 = vmax.xlane.f32.xlu0 %v1009
    %v1011 = vpop.xlane.xlu0 %1010
    %v1012 = vsel %vm282, %v990, -inf
    %1013 = vmax.xlane.f32.xlu0 %v1012
    %v1014 = vpop.xlane.xlu0 %1013
    %v1015 = vsub.f32 %v983, %v993
    %v1016 = vsub.f32 %v984, %v996
    %v1017 = vsub.f32 %v985, %v999
    %v1018 = vsub.f32 %v986, %v1002
    %v1019 = vsub.f32 %v987, %v1005
    %v1020 = vsub.f32 %v988, %v1008
    %v1021 = vsub.f32 %v989, %v1011
    %v1022 = vsub.f32 %v990, %v1014
    %v1023 = vmul.f32 %v1015, 1.442695
    %v1024 = vpow.pop %v1023
    %v1025 = vmul.f32 %v1016, 1.442695
    %v1026 = vpow.pop %v1025
    %v1027 = vmul.f32 %v1017, 1.442695
    %v1028 = vpow.pop %v1027
    %v1029 = vmul.f32 %v1018, 1.442695
    %v1030 = vpow.pop %v1029
    %v1031 = vmul.f32 %v1019, 1.442695
    %v1032 = vpow.pop %v1031
    %v1033 = vmul.f32 %v1020, 1.442695
    %v1034 = vpow.pop %v1033
    %v1035 = vmul.f32 %v1021, 1.442695
    %v1036 = vpow.pop %v1035
    %v1037 = vmul.f32 %v1022, 1.442695
    %v1038 = vpow.pop %v1037
    %v1039 = vsel %vm282, %v1024, 0.0
    %1040 = vadd.xlane.f32.xlu0 %v1039
    %v1041 = vpop.xlane.xlu0 %1040
    %v1042 = vsel %vm282, %v1026, 0.0
    %1043 = vadd.xlane.f32.xlu0 %v1042
    %v1044 = vpop.xlane.xlu0 %1043
    %v1045 = vsel %vm282, %v1028, 0.0
    %1046 = vadd.xlane.f32.xlu0 %v1045
    %v1047 = vpop.xlane.xlu0 %1046
    %v1048 = vsel %vm282, %v1030, 0.0
    %1049 = vadd.xlane.f32.xlu0 %v1048
    %v1050 = vpop.xlane.xlu0 %1049
    %v1051 = vsel %vm282, %v1032, 0.0
    %1052 = vadd.xlane.f32.xlu0 %v1051
    %v1053 = vpop.xlane.xlu0 %1052
    %v1054 = vsel %vm282, %v1034, 0.0
    %1055 = vadd.xlane.f32.xlu0 %v1054
    %v1056 = vpop.xlane.xlu0 %1055
    %v1057 = vsel %vm282, %v1036, 0.0
    %1058 = vadd.xlane.f32.xlu0 %v1057
    %v1059 = vpop.xlane.xlu0 %1058
    %v1060 = vsel %vm282, %v1038, 0.0
    %1061 = vadd.xlane.f32.xlu0 %v1060
    %v1062 = vpop.xlane.xlu0 %1061
    %v1063 = vrcp.pop %v1041
    %v1064 = vrcp.pop %v1044
    %v1065 = vrcp.pop %v1047
    %v1066 = vrcp.pop %v1050
    %v1067 = vrcp.pop %v1053
    %v1068 = vrcp.pop %v1056
    %v1069 = vrcp.pop %v1059
    %v1070 = vrcp.pop %v1062
    %v1071 = vmul.f32 %v1024, %v1063
    %v1072 = vmul.f32 %v1026, %v1064
    %v1073 = vmul.f32 %v1028, %v1065
    %v1074 = vmul.f32 %v1030, %v1066
    %v1075 = vmul.f32 %v1032, %v1067
    %v1076 = vmul.f32 %v1034, %v1068
    %v1077 = vmul.f32 %v1036, %v1069
    %v1078 = vmul.f32 %v1038, %v1070
    %v1080 = vsel %vm282, %v1071, 0
    %v1083 = vsel %vm282, %v1072, 0
    %v1086 = vsel %vm282, %v1073, 0
    %v1089 = vsel %vm282, %v1074, 0
    %v1092 = vsel %vm282, %v1075, 0
    %v1095 = vsel %vm282, %v1076, 0
    %v1098 = vsel %vm282, %v1077, 0
    %v1101 = vsel %vm282, %v1078, 0
    %1103 = vmatpush.msra.mxu0 0.0
    %1104 = vmatpush.msra.mxu0 0.0
    %1105 = vmatpush.msra.mxu0 0.0
    %1106 = vmatpush.msra.mxu0 0.0
    %1107 = vmatpush.msra.mxu0 0.0
    %1108 = vmatpush.msra.mxu0 0.0
    %1109 = vmatpush.msra.mxu0 0.0
    %1110 = vmatpush.msra.mxu0 0.0
    %1111 = vmatpush.msra.mxu0 0.0
    %1112 = vmatpush.msra.mxu0 0.0
    %1113 = vmatpush.msra.mxu0 0.0
    %1114 = vmatpush.msra.mxu0 0.0
    %1115 = vmatpush.msra.mxu0 0.0
    %1116 = vmatpush.msra.mxu0 0.0
    %1117 = vmatpush.msra.mxu0 %v789
    %1118 = vmatpush.msra.mxu0 %v788
    %1119 = vmatmul.f32.gmra.mxu0 %v1080
    %v1120 = vpop.f32.mrf.mxu0
    %v1121 = vadd.f32 0.0, %v1120
    %1122 = vmatmul.f32.gmra.mxu0 %v1083
    %v1123 = vpop.f32.mrf.mxu0
    %v1124 = vadd.f32 0.0, %v1123
    %1125 = vmatmul.f32.gmra.mxu0 %v1086
    %v1126 = vpop.f32.mrf.mxu0
    %v1127 = vadd.f32 0.0, %v1126
    %1128 = vmatmul.f32.gmra.mxu0 %v1089
    %v1129 = vpop.f32.mrf.mxu0
    %v1130 = vadd.f32 0.0, %v1129
    %1131 = vmatmul.f32.gmra.mxu0 %v1092
    %v1132 = vpop.f32.mrf.mxu0
    %v1133 = vadd.f32 0.0, %v1132
    %1134 = vmatmul.f32.gmra.mxu0 %v1095
    %v1135 = vpop.f32.mrf.mxu0
    %v1136 = vadd.f32 0.0, %v1135
    %1137 = vmatmul.f32.gmra.mxu0 %v1098
    %v1138 = vpop.f32.mrf.mxu0
    %v1139 = vadd.f32 0.0, %v1138
    %1140 = vmatmul.f32.gmra.mxu0 %v1101
    %v1141 = vpop.f32.mrf.mxu0
    %v1142 = vadd.f32 0.0, %v1141
    %1143 = vdwg.mxu0
    %s1144 = scalar_lea.vmem [#allocation2], 128
    %v1145 = vld [vmem:[%s1144] sm:$0xff]
    %v1146 = vld [vmem:[%s1144 + $0x8] sm:$0xff]
    %v1147 = vld [vmem:[%s1144 + $0x10] sm:$0xff]
    %v1148 = vld [vmem:[%s1144 + $0x18] sm:$0xff]
    %s1149 = scalar_lea.vmem [#allocation2], 160
    %v1150 = vld [vmem:[%s1149] sm:$0xff]
    %v1151 = vld [vmem:[%s1149 + $0x8] sm:$0xff]
    %v1152 = vld [vmem:[%s1149 + $0x10] sm:$0xff]
    %v1153 = vld [vmem:[%s1149 + $0x18] sm:$0xff]
    %v1155 = vsel %vm89, %v1127, 0
    %v1158 = vsel %vm89, %v1130, 0
    %1160 = vmatpush.msra.mxu0 0.0
    %1161 = vmatpush.msra.mxu0 0.0
    %1162 = vmatpush.msra.mxu0 0.0
    %1163 = vmatpush.msra.mxu0 0.0
    %1164 = vmatpush.msra.mxu0 0.0
    %1165 = vmatpush.msra.mxu0 0.0
    %1166 = vmatpush.msra.mxu0 0.0
    %1167 = vmatpush.msra.mxu0 0.0
    %1168 = vmatpush.msra.mxu0 0.0
    %1169 = vmatpush.msra.mxu0 0.0
    %1170 = vmatpush.msra.mxu0 0.0
    %1171 = vmatpush.msra.mxu0 0.0
    %1172 = vmatpush.msra.mxu0 %v1153
    %1173 = vmatpush.msra.mxu0 %v1152
    %1174 = vmatpush.msra.mxu0 %v1151
    %1175 = vmatpush.msra.mxu0 %v1150
    %1176 = vmatmul.f32.gmra.mxu0 %v1155
    %v1177 = vpop.f32.mrf.mxu0
    %v1178 = vadd.f32 0.0, %v1177
    %1179 = vmatmul.f32.gmra.mxu0 %v1158
    %v1180 = vpop.f32.mrf.mxu0
    %v1181 = vadd.f32 0.0, %v1180
    %1182 = vdwg.mxu0
    %v1184 = vsel %vm89, %v1121, 0
    %v1187 = vsel %vm89, %v1124, 0
    %1189 = vmatpush.msra.mxu0 0.0
    %1190 = vmatpush.msra.mxu0 0.0
    %1191 = vmatpush.msra.mxu0 0.0
    %1192 = vmatpush.msra.mxu0 0.0
    %1193 = vmatpush.msra.mxu0 0.0
    %1194 = vmatpush.msra.mxu0 0.0
    %1195 = vmatpush.msra.mxu0 0.0
    %1196 = vmatpush.msra.mxu0 0.0
    %1197 = vmatpush.msra.mxu0 0.0
    %1198 = vmatpush.msra.mxu0 0.0
    %1199 = vmatpush.msra.mxu0 0.0
    %1200 = vmatpush.msra.mxu0 0.0
    %1201 = vmatpush.msra.mxu0 %v1148
    %1202 = vmatpush.msra.mxu0 %v1147
    %1203 = vmatpush.msra.mxu0 %v1146
    %1204 = vmatpush.msra.mxu0 %v1145
    %1205 = vmatmul.f32.gmra.mxu0 %v1184
    %v1206 = vpop.f32.mrf.mxu0
    %v1207 = vadd.f32 %v1178, %v1206
    %1208 = vmatmul.f32.gmra.mxu0 %v1187
    %v1209 = vpop.f32.mrf.mxu0
    %v1210 = vadd.f32 %v1181, %v1209
    %1211 = vdwg.mxu0
    %s1212 = scalar_lea.vmem [#allocation2], 192
    %v1213 = vld [vmem:[%s1212] sm:$0xff]
    %v1214 = vld [vmem:[%s1212 + $0x8] sm:$0xff]
    %v1215 = vld [vmem:[%s1212 + $0x10] sm:$0xff]
    %v1216 = vld [vmem:[%s1212 + $0x18] sm:$0xff]
    %v1218 = vsel %vm89, %v1133, 0
    %v1221 = vsel %vm89, %v1136, 0
    %1223 = vmatpush.msra.mxu0 0.0
    %1224 = vmatpush.msra.mxu0 0.0
    %1225 = vmatpush.msra.mxu0 0.0
    %1226 = vmatpush.msra.mxu0 0.0
    %1227 = vmatpush.msra.mxu0 0.0
    %1228 = vmatpush.msra.mxu0 0.0
    %1229 = vmatpush.msra.mxu0 0.0
    %1230 = vmatpush.msra.mxu0 0.0
    %1231 = vmatpush.msra.mxu0 0.0
    %1232 = vmatpush.msra.mxu0 0.0
    %1233 = vmatpush.msra.mxu0 0.0
    %1234 = vmatpush.msra.mxu0 0.0
    %1235 = vmatpush.msra.mxu0 %v1216
    %1236 = vmatpush.msra.mxu0 %v1215
    %1237 = vmatpush.msra.mxu0 %v1214
    %1238 = vmatpush.msra.mxu0 %v1213
    %1239 = vmatmul.f32.gmra.mxu0 %v1218
    %v1240 = vpop.f32.mrf.mxu0
    %v1241 = vadd.f32 0.0, %v1240
    %1242 = vmatmul.f32.gmra.mxu0 %v1221
    %v1243 = vpop.f32.mrf.mxu0
    %v1244 = vadd.f32 0.0, %v1243
    %1245 = vdwg.mxu0
    %v1246 = vadd.f32 %v1207, %v1241
    %v1247 = vadd.f32 %v1210, %v1244
    %s1248 = scalar_lea.vmem [#allocation2], 224
    %v1249 = vld [vmem:[%s1248] sm:$0xff]
    %v1250 = vld [vmem:[%s1248 + $0x8] sm:$0xff]
    %v1251 = vld [vmem:[%s1248 + $0x10] sm:$0xff]
    %v1252 = vld [vmem:[%s1248 + $0x18] sm:$0xff]
    %v1254 = vsel %vm89, %v1139, 0
    %v1257 = vsel %vm89, %v1142, 0
    %1259 = vmatpush.msra.mxu0 0.0
    %1260 = vmatpush.msra.mxu0 0.0
    %1261 = vmatpush.msra.mxu0 0.0
    %1262 = vmatpush.msra.mxu0 0.0
    %1263 = vmatpush.msra.mxu0 0.0
    %1264 = vmatpush.msra.mxu0 0.0
    %1265 = vmatpush.msra.mxu0 0.0
    %1266 = vmatpush.msra.mxu0 0.0
    %1267 = vmatpush.msra.mxu0 0.0
    %1268 = vmatpush.msra.mxu0 0.0
    %1269 = vmatpush.msra.mxu0 0.0
    %1270 = vmatpush.msra.mxu0 0.0
    %1271 = vmatpush.msra.mxu0 %v1252
    %1272 = vmatpush.msra.mxu0 %v1251
    %1273 = vmatpush.msra.mxu0 %v1250
    %1274 = vmatpush.msra.mxu0 %v1249
    %1275 = vmatmul.f32.gmra.mxu0 %v1254
    %v1276 = vpop.f32.mrf.mxu0
    %v1277 = vadd.f32 0.0, %v1276
    %1278 = vmatmul.f32.gmra.mxu0 %v1257
    %v1279 = vpop.f32.mrf.mxu0
    %v1280 = vadd.f32 0.0, %v1279
    %1281 = vdwg.mxu0
    %v1282 = vadd.f32 %v1246, %v1277
    %v1283 = vadd.f32 %v1247, %v1280
    %v1284 = vadd.f32 %v788, %v1282
    %v1285 = vadd.f32 %v789, %v1283
    %s1286 = scalar_lea.vmem [#allocation5], 6
    %v1287 = vld [vmem:[%s1286] sm:$0x1]
    %v1289 = vperm.slane %v1287, 0
    %v1291 = vadd.f32 %v1284, %v1289
    %v1292 = vadd.f32 %v1285, %v1289
    %s1293 = scalar_lea.vmem [#allocation5], 7
    %v1294 = vld [vmem:[%s1293] sm:$0x1]
    %s1295 = scalar_lea.vmem [#allocation5], 8
    %v1296 = vld [vmem:[%s1295] sm:$0x1]
    %v1297 = vsel %vm89, %v1291, 0.0
    %1298 = vadd.xlane.f32.xlu0 %v1297
    %v1299 = vpop.xlane.xlu0 %1298
    %v1300 = vsel %vm89, %v1292, 0.0
    %1301 = vadd.xlane.f32.xlu0 %v1300
    %v1302 = vpop.xlane.xlu0 %1301
    %v1303 = vmul.f32 %v1299, %v599
    %v1304 = vmul.f32 %v1302, %v599
    %v1305 = vsub.f32 %v1291, %v1303
    %v1306 = vsub.f32 %v1292, %v1304
    %v1307 = vmul.f32 %v1305, %v1305
    %v1308 = vmul.f32 %v1306, %v1306
    %v1309 = vsel %vm89, %v1307, 0.0
    %1310 = vadd.xlane.f32.xlu0 %v1309
    %v1311 = vpop.xlane.xlu0 %1310
    %v1312 = vsel %vm89, %v1308, 0.0
    %1313 = vadd.xlane.f32.xlu0 %v1312
    %v1314 = vpop.xlane.xlu0 %1313
    %v1315 = vmul.f32 %v1311, %v599
    %v1316 = vmul.f32 %v1314, %v599
    %v1317 = vadd.f32 %v1315, 1e-05
    %v1318 = vadd.f32 %v1316, 1e-05
    %v1319 = vrsqrt.pop %v1317
    %v1320 = vmul.f32 %v1319, %v1317
    %v1321 = vmul.f32 %v1320, %v1319
    %v1322 = vmul.f32 0.5, %v1321
    %v1323 = vsub.f32 1.5, %v1322
    %v1324 = vmul.f32 %v1319, %v1323
    %vm1325 = vweird.f32 %v1317
    %vm1326 = vweird.f32 %v1319
    %vm1327 = vmor %vm1325, %vm1326
    %v1328 = vsel %vm1327, %v1319, %v1324
    %v1329 = vrsqrt.pop %v1318
    %v1330 = vmul.f32 %v1329, %v1318
    %v1331 = vmul.f32 %v1330, %v1329
    %v1332 = vmul.f32 0.5, %v1331
    %v1333 = vsub.f32 1.5, %v1332
    %v1334 = vmul.f32 %v1329, %v1333
    %vm1335 = vweird.f32 %v1318
    %vm1336 = vweird.f32 %v1329
    %vm1337 = vmor %vm1335, %vm1336
    %v1338 = vsel %vm1337, %v1329, %v1334
    %v1339 = vmul.f32 %v1305, %v1328
    %v1340 = vmul.f32 %v1306, %v1338
    %v1342 = vperm.slane %v1294, 0
    %v1344 = vmul.f32 %v1339, %v1342
    %v1345 = vmul.f32 %v1340, %v1342
    %v1347 = vperm.slane %v1296, 0
    %v1349 = vadd.f32 %v1344, %v1347
    %v1350 = vadd.f32 %v1345, %v1347
    %s1351 = scalar_lea.vmem %s5, 32
    %v1352 = vld [vmem:[%s1351] sm:$0xff]
    %v1353 = vld [vmem:[%s1351 + $0x8] sm:$0xff]
    %v1354 = vld [vmem:[%s1351 + $0x10] sm:$0xff]
    %v1355 = vld [vmem:[%s1351 + $0x18] sm:$0xff]
    %s1356 = scalar_lea.vmem %s6, 1
    %v1357 = vld [vmem:[%s1356] sm:$0x1]
    %v1359 = vperm.slane %v1357, 0
    %v1362 = vsel %vm89, %v1349, 0
    %v1365 = vsel %vm89, %v1350, 0
    %1367 = vmatpush.msra.mxu0 0.0
    %1368 = vmatpush.msra.mxu0 0.0
    %1369 = vmatpush.msra.mxu0 0.0
    %1370 = vmatpush.msra.mxu0 0.0
    %1371 = vmatpush.msra.mxu0 0.0
    %1372 = vmatpush.msra.mxu0 0.0
    %1373 = vmatpush.msra.mxu0 0.0
    %1374 = vmatpush.msra.mxu0 0.0
    %1375 = vmatpush.msra.mxu0 0.0
    %1376 = vmatpush.msra.mxu0 0.0
    %1377 = vmatpush.msra.mxu0 0.0
    %1378 = vmatpush.msra.mxu0 0.0
    %1379 = vmatpush.msra.mxu0 %v1355
    %1380 = vmatpush.msra.mxu0 %v1354
    %1381 = vmatpush.msra.mxu0 %v1353
    %1382 = vmatpush.msra.mxu0 %v1352
    %1383 = vmatmul.f32.gmra.mxu0 %v1362
    %v1384 = vpop.f32.mrf.mxu0
    %v1385 = vadd.f32 %v1359, %v1384
    %1386 = vmatmul.f32.gmra.mxu0 %v1365
    %v1387 = vpop.f32.mrf.mxu0
    %v1388 = vadd.f32 %v1359, %v1387
    %1389 = vdwg.mxu0
    %v1390 = vmax.f32 %v1385, 0.0
    %v1391 = vmax.f32 %v1388, 0.0
    %s1392 = scalar_lea.vmem %s7, 64
    %v1393 = vld [vmem:[%s1392] sm:$0xff]
    %v1394 = vld [vmem:[%s1392 + $0x8] sm:$0xff]
    %v1395 = vld [vmem:[%s1392 + $0x10] sm:$0xff]
    %v1396 = vld [vmem:[%s1392 + $0x18] sm:$0xff]
    %v1397 = vld [vmem:[%s1392 + $0x20] sm:$0xff]
    %v1398 = vld [vmem:[%s1392 + $0x28] sm:$0xff]
    %v1399 = vld [vmem:[%s1392 + $0x30] sm:$0xff]
    %v1400 = vld [vmem:[%s1392 + $0x38] sm:$0xff]
    %s1401 = scalar_lea.vmem [#allocation5], 9
    %v1402 = vld [vmem:[%s1401] sm:$0x1]
    %v1404 = vperm.slane %v1402, 0
    %v1407 = vsel %vm700, %v1390, 0
    %v1410 = vsel %vm700, %v1391, 0
    %1412 = vmatpush.msra.mxu0 0.0
    %1413 = vmatpush.msra.mxu0 0.0
    %1414 = vmatpush.msra.mxu0 0.0
    %1415 = vmatpush.msra.mxu0 0.0
    %1416 = vmatpush.msra.mxu0 0.0
    %1417 = vmatpush.msra.mxu0 0.0
    %1418 = vmatpush.msra.mxu0 0.0
    %1419 = vmatpush.msra.mxu0 0.0
    %1420 = vmatpush.msra.mxu0 %v1400
    %1421 = vmatpush.msra.mxu0 %v1399
    %1422 = vmatpush.msra.mxu0 %v1398
    %1423 = vmatpush.msra.mxu0 %v1397
    %1424 = vmatpush.msra.mxu0 %v1396
    %1425 = vmatpush.msra.mxu0 %v1395
    %1426 = vmatpush.msra.mxu0 %v1394
    %1427 = vmatpush.msra.mxu0 %v1393
    %1428 = vmatmul.f32.gmra.mxu0 %v1407
    %v1429 = vpop.f32.mrf.mxu0
    %v1430 = vadd.f32 %v1404, %v1429
    %1431 = vmatmul.f32.gmra.mxu0 %v1410
    %v1432 = vpop.f32.mrf.mxu0
    %v1433 = vadd.f32 %v1404, %v1432
    %1434 = vdwg.mxu0
    %v1435 = vadd.f32 %v1349, %v1430
    %v1436 = vadd.f32 %v1350, %v1433
    %s1437 = scalar_lea.vmem [#allocation5], 10
    %v1438 = vld [vmem:[%s1437] sm:$0x1]
    %s1439 = scalar_lea.vmem [#allocation5], 11
    %v1440 = vld [vmem:[%s1439] sm:$0x1]
    %v1441 = vsel %vm89, %v1435, 0.0
    %1442 = vadd.xlane.f32.xlu0 %v1441
    %v1443 = vpop.xlane.xlu0 %1442
    %v1444 = vsel %vm89, %v1436, 0.0
    %1445 = vadd.xlane.f32.xlu0 %v1444
    %v1446 = vpop.xlane.xlu0 %1445
    %v1447 = vmul.f32 %v1443, %v599
    %v1448 = vmul.f32 %v1446, %v599
    %v1449 = vsub.f32 %v1435, %v1447
    %v1450 = vsub.f32 %v1436, %v1448
    %v1451 = vmul.f32 %v1449, %v1449
    %v1452 = vmul.f32 %v1450, %v1450
    %v1453 = vsel %vm89, %v1451, 0.0
    %1454 = vadd.xlane.f32.xlu0 %v1453
    %v1455 = vpop.xlane.xlu0 %1454
    %v1456 = vsel %vm89, %v1452, 0.0
    %1457 = vadd.xlane.f32.xlu0 %v1456
    %v1458 = vpop.xlane.xlu0 %1457
    %v1459 = vmul.f32 %v1455, %v599
    %v1460 = vmul.f32 %v1458, %v599
    %v1461 = vadd.f32 %v1459, 1e-05
    %v1462 = vadd.f32 %v1460, 1e-05
    %v1463 = vrsqrt.pop %v1461
    %v1464 = vmul.f32 %v1463, %v1461
    %v1465 = vmul.f32 %v1464, %v1463
    %v1466 = vmul.f32 0.5, %v1465
    %v1467 = vsub.f32 1.5, %v1466
    %v1468 = vmul.f32 %v1463, %v1467
    %vm1469 = vweird.f32 %v1461
    %vm1470 = vweird.f32 %v1463
    %vm1471 = vmor %vm1469, %vm1470
    %v1472 = vsel %vm1471, %v1463, %v1468
    %v1473 = vrsqrt.pop %v1462
    %v1474 = vmul.f32 %v1473, %v1462
    %v1475 = vmul.f32 %v1474, %v1473
    %v1476 = vmul.f32 0.5, %v1475
    %v1477 = vsub.f32 1.5, %v1476
    %v1478 = vmul.f32 %v1473, %v1477
    %vm1479 = vweird.f32 %v1462
    %vm1480 = vweird.f32 %v1473
    %vm1481 = vmor %vm1479, %vm1480
    %v1482 = vsel %vm1481, %v1473, %v1478
    %v1483 = vmul.f32 %v1449, %v1472
    %v1484 = vmul.f32 %v1450, %v1482
    %v1486 = vperm.slane %v1438, 0
    %v1488 = vmul.f32 %v1483, %v1486
    %v1489 = vmul.f32 %v1484, %v1486
    %v1491 = vperm.slane %v1440, 0
    %v1493 = vadd.f32 %v1488, %v1491
    %v1494 = vadd.f32 %v1489, %v1491
    %v1495 = vld [vmem:[%s9] sm:$0xff]
    %v1496 = vld [vmem:[%s9 + $0x8] sm:$0xff]
    %v1497 = vld [vmem:[%s9 + $0x10] sm:$0xff]
    %v1498 = vld [vmem:[%s9 + $0x18] sm:$0xff]
    %v1499 = vld [vmem:[%s10] sm:$0x1]
    %v1501 = vperm.slane %v1499, 0
    %v1504 = vsel %vm89, %v1493, 0
    %v1507 = vsel %vm89, %v1494, 0
    %1509 = vmatpush.msra.mxu0 0.0
    %1510 = vmatpush.msra.mxu0 0.0
    %1511 = vmatpush.msra.mxu0 0.0
    %1512 = vmatpush.msra.mxu0 0.0
    %1513 = vmatpush.msra.mxu0 0.0
    %1514 = vmatpush.msra.mxu0 0.0
    %1515 = vmatpush.msra.mxu0 0.0
    %1516 = vmatpush.msra.mxu0 0.0
    %1517 = vmatpush.msra.mxu0 0.0
    %1518 = vmatpush.msra.mxu0 0.0
    %1519 = vmatpush.msra.mxu0 0.0
    %1520 = vmatpush.msra.mxu0 0.0
    %1521 = vmatpush.msra.mxu0 %v1498
    %1522 = vmatpush.msra.mxu0 %v1497
    %1523 = vmatpush.msra.mxu0 %v1496
    %1524 = vmatpush.msra.mxu0 %v1495
    %1525 = vmatmul.f32.gmra.mxu0 %v1504
    %v1526 = vpop.f32.mrf.mxu0
    %v1527 = vadd.f32 %v1501, %v1526
    %1528 = vmatmul.f32.gmra.mxu0 %v1507
    %v1529 = vpop.f32.mrf.mxu0
    %v1530 = vadd.f32 %v1501, %v1529
    %1531 = vdwg.mxu0
    %vm1532 = vcmp.ge.f32.partialorder %v1527, 0.0
    %vm1533 = vcmp.ge.f32.partialorder %v1530, 0.0
    %v1534 = vmul.f32 %v1527, 0.1
    %v1535 = vmul.f32 %v1530, 0.1
    %v1536 = vsel %vm1532, %v1527, %v1534
    %v1537 = vsel %vm1533, %v1530, %v1535
    %s1538 = scalar_lea.vmem %s9, 32
    %v1539 = vld [vmem:[%s1538] sm:$0xff]
    %v1540 = vld [vmem:[%s1538 + $0x8] sm:$0xff]
    %v1541 = vld [vmem:[%s1538 + $0x10] sm:$0xff]
    %v1542 = vld [vmem:[%s1538 + $0x18] sm:$0xff]
    %s1543 = scalar_lea.vmem %s10, 1
    %v1544 = vld [vmem:[%s1543] sm:$0x1]
    %v1546 = vperm.slane %v1544, 0
    %v1549 = vsel %vm89, %v1536, 0
    %v1552 = vsel %vm89, %v1537, 0
    %1554 = vmatpush.msra.mxu0 0.0
    %1555 = vmatpush.msra.mxu0 0.0
    %1556 = vmatpush.msra.mxu0 0.0
    %1557 = vmatpush.msra.mxu0 0.0
    %1558 = vmatpush.msra.mxu0 0.0
    %1559 = vmatpush.msra.mxu0 0.0
    %1560 = vmatpush.msra.mxu0 0.0
    %1561 = vmatpush.msra.mxu0 0.0
    %1562 = vmatpush.msra.mxu0 0.0
    %1563 = vmatpush.msra.mxu0 0.0
    %1564 = vmatpush.msra.mxu0 0.0
    %1565 = vmatpush.msra.mxu0 0.0
    %1566 = vmatpush.msra.mxu0 %v1542
    %1567 = vmatpush.msra.mxu0 %v1541
    %1568 = vmatpush.msra.mxu0 %v1540
    %1569 = vmatpush.msra.mxu0 %v1539
    %1570 = vmatmul.f32.gmra.mxu0 %v1549
    %v1571 = vpop.f32.mrf.mxu0
    %v1572 = vadd.f32 %v1546, %v1571
    %1573 = vmatmul.f32.gmra.mxu0 %v1552
    %v1574 = vpop.f32.mrf.mxu0
    %v1575 = vadd.f32 %v1546, %v1574
    %1576 = vdwg.mxu0
    %1577 = vst.msk [vmem:[#allocation7] sm:$0xff] %vm89, %v1572
    %1578 = vst.msk [vmem:[#allocation7 + $0x8] sm:$0xff] %vm89, %v1575
    // Predicated region
    $region54: #{tpu_custom_call.1} parent=1 // pred_check
      _
    $region55: #{tpu_custom_call.1} parent=1 // pred_check_branch
      %1580 = sbr.rel (0) target = $region57
    $region56: #{tpu_custom_call.1} parent=1 // pred_region
      %1582 = vsyncadd [#allocation4], 0
      %s1583 = sshll.u32 [#allocation7], 4
      %s1584 = int_to_ptr.vmem [resolvable:$true] %s1583
      %s1585 = sshll.u32 %s11, 4
      %s1586 = int_to_ptr.hbm [resolvable:$true] %s1585
      %1591 = dma.vmem_to_hbm [thread:$0]  %s1584, 256, %s1586, [#allocation4], 128, 128, 8
    $region57: #{tpu_custom_call.1} parent=1 // pred_fallthru
      _
    // Predicated region
    $region58: #{tpu_custom_call.1} parent=1 // pred_check
      _
    $region59: #{tpu_custom_call.1} parent=1 // pred_check_branch
      %1593 = sbr.rel (0) target = $region61
    $region60: #{tpu_custom_call.1} parent=1 // pred_region
      %1595 = dma.done [#allocation4], 256
    $region61: #{tpu_custom_call.1} parent=1 // pred_fallthru
      _
    %1596 = vsyncpa [#allocation3], 1
    %1597 = vsyncpa [#allocation6], 1
    %1598 = vsyncpa [#allocation4], 1

</llo_original>
